<compile_context>
chip_gen: v5e
topology: v5e:2x2
jax: 0.10.0
libtpu: 0.0.40
codegen_flags: <defaults>
</compile_context>

<pallas_src>
import functools
import numpy as np
import jax
import jax.numpy as jnp
from jax.experimental import pallas as pl
from jax.experimental.pallas import tpu as pltpu


# ----------------------- synthetic environment configuration -----------------------
CLASSES = {
    # name : n_obj per class, n_field ('all'), n_statefield ('state'), attribute dim per state field
    "agent": dict(n_obj=3, n_field=3, n_statefield=2, d_attr=4),
    "item":  dict(n_obj=2, n_field=2, n_statefield=1, d_attr=4),
}
BATCH = 2
DIM_IN = 8          # dim_variable_enc
DIM_LOCAL = 16
DIM_GLOBAL = 16
DIM_K = 16
DIM_V = 16
DIM_HIDDEN = 32     # dim_decoder_hidden
DIM_ID = 0          # GRU id encoder disabled

NSF_TOTAL = sum(c["n_statefield"] for c in CLASSES.values())
NF_TOTAL = sum(c["n_field"] for c in CLASSES.values())


def _round_up(x, m):
    return (x + m - 1) // m * m


# field offsets over the 'all'-field axis (for slicing the global mask per class)
FIELD_OFF = {}
_fo = 0
for _name, _c in CLASSES.items():
    FIELD_OFF[_name] = (_fo, _fo + _c["n_field"])
    _fo += _c["n_field"]

# static per-class layout metadata (rows are batch-stacked: row = b * n_obj + n)
META = {}
_kv = _sf = _lane = 0
for _name, _c in CLASSES.items():
    _rows = BATCH * _c["n_obj"]
    META[_name] = dict(rows=_rows, nsf=_c["n_statefield"], nf=_c["n_field"],
                       da=_c["d_attr"], nfdi=_c["n_field"] * DIM_IN,
                       kv_off=_kv, sf_off=_sf, out_lane=_lane)
    _kv += _round_up(_rows, 8)          # 8-aligned per-class key/value row blocks
    _sf += _c["n_statefield"]
    _lane += _c["n_statefield"] * 2 * _c["d_attr"]

KV_ROWS = _round_up(_kv, 8)             # 16: batch-stacked keys of all classes (+pad)
OUT_ROWS = _round_up(max(m["rows"] for m in META.values()), 8)   # 8
OUT_LANES = _round_up(_lane, 128)       # 128: lane-dense fused output slab
CONST_LANES = 32
NEG_MASK = -1e30
ATTN_SCALE = 1.0 / float(np.sqrt(DIM_K))


# ----------------------------- static constant packing ------------------------------
class _SlabPacker:
    """Packs 2-D f32 blocks into one (R, CONST_LANES) slab, 8-row aligned entries."""

    def __init__(self, lanes):
        self.lanes = lanes
        self.offsets = {}
        self.pieces = []
        self.rows = 0

    def add(self, key, arr):
        arr = np.asarray(arr, np.float32)
        if arr.ndim == 1:
            arr = arr[None, :]
        r, c = arr.shape
        assert c <= self.lanes, (key, arr.shape)
        self.offsets[key] = (self.rows, r, c)
        padded = np.zeros((_round_up(r, 8), self.lanes), np.float32)
        padded[:r, :c] = arr
        self.pieces.append(padded)
        self.rows += padded.shape[0]

    def finish(self):
        return np.concatenate(self.pieces, axis=0)


def _make_attn_bias(qname):
    """Additive attention-mask bias for query class `qname`.

    Reproduces Inferer.get_attn_masks with objmasks=None on the batch-stacked,
    zero-padded key layout: valid iff same batch element, not the in-class self
    object, and not a padding row."""
    rows_q = META[qname]["rows"]
    noc_q = CLASSES[qname]["n_obj"]
    bias = np.full((rows_q, KV_ROWS), NEG_MASK, np.float32)
    for kname, kc in CLASSES.items():
        km = META[kname]
        noc_k = kc["n_obj"]
        for b in range(BATCH):
            for nk in range(noc_k):
                col = km["kv_off"] + b * noc_k + nk
                for nq in range(noc_q):
                    if kname == qname and nk == nq:
                        continue                      # self-attention diagonal
                    bias[b * noc_q + nq, col] = 0.0
    return bias


def pack_params(params):
    """One-time, init-side packing of all weights/biases/masks into one constant slab.

    f_local∘fq and fk|fv are pure linear compositions in the reference module, so they
    are folded/lane-stacked here (exact up to f32 reassociation)."""
    pk = _SlabPacker(CONST_LANES)
    for name, c in CLASSES.items():
        p = params[name]
        nsf = c["n_statefield"]
        for sg in range(NSF_TOTAL):
            pk.add(("Wg", name, sg), p["Wg"][sg])
            pk.add(("bg", name, sg), p["bg"][sg])
        for s in range(nsf):
            Wl = np.asarray(p["Wl"][s], np.float32); bl = np.asarray(p["bl"][s], np.float32)
            Wq = np.asarray(p["Wq"][s], np.float32); bq = np.asarray(p["bq"][s], np.float32)
            Wk = np.asarray(p["Wk"][s], np.float32); bk = np.asarray(p["bk"][s], np.float32)
            Wv = np.asarray(p["Wv"][s], np.float32); bv = np.asarray(p["bv"][s], np.float32)
            # [ local | q ] in one dot:  q = (x@Wl + bl)@Wq + bq = x@(Wl@Wq) + (bl@Wq + bq)
            pk.add(("Wlq", name, s), np.concatenate([Wl, Wl @ Wq], axis=1))
            pk.add(("blq", name, s), np.concatenate([bl, bl @ Wq + bq]))
            # [ k | v ] in one dot
            pk.add(("Wkv", name, s), np.concatenate([Wk, Wv], axis=1))
            pk.add(("bkv", name, s), np.concatenate([bk, bv]))
            pk.add(("Wd1", name, s), p["Wd1"][s]); pk.add(("bd1", name, s), p["bd1"][s])
            pk.add(("Wd2", name, s), p["Wd2"][s]); pk.add(("bd2", name, s), p["bd2"][s])
            h = p["heads"][s]
            pk.add(("Whead", name, s),
                   np.concatenate([np.asarray(h["Wm"][0], np.float32),
                                   np.asarray(h["Ws"][0], np.float32)], axis=1))
            pk.add(("bhead", name, s),
                   np.concatenate([np.asarray(h["bm"][0], np.float32),
                                   np.asarray(h["bs"][0], np.float32)]))
        pk.add(("attnbias", name), _make_attn_bias(name))
    return jnp.asarray(pk.finish()), pk.offsets


# ------------------------------ fused forward kernel --------------------------------
def _leaky_relu(x):
    return jnp.where(x >= 0, x, 0.01 * x)      # nn.LeakyReLU default slope


def _fused_inferer_kernel(*refs, offsets):
    n_cls = len(CLASSES)
    const_ref = refs[0]
    dyn = {name: refs[1 + i] for i, name in enumerate(CLASSES)}
    out_ref = refs[1 + n_cls]
    g_all_ref = refs[2 + n_cls]                 # VMEM scratch: (NSF_TOTAL, KV_ROWS, DIM_GLOBAL)

    def W(*key):
        off, r, c = offsets[key]
        return const_ref[off:off + r, :c]

    # Zero the padded rows/lanes so stale VMEM never reaches a matmul or the output DMA.
    g_all_ref[...] = jnp.zeros(g_all_ref.shape, jnp.float32)
    out_ref[...] = jnp.zeros(out_ref.shape, out_ref.dtype)

    # ---- Phase A: global encodings of every class for ALL state fields ----
    # encode_global = one (rows, nf*Di) @ (nf*Di, DIM_GLOBAL) dot per (class, sg);
    # results land in the shared g_all block (concatenated object axis, batch-stacked).
    for name, m in META.items():
        x = dyn[name][0]                                            # (rows, nf*Di)
        for sg in range(NSF_TOTAL):
            xm = x * dyn[name][1 + m["nsf"] + sg]                   # expanded global mask
            g = jnp.dot(xm, W("Wg", name, sg),
                        preferred_element_type=jnp.float32) + W("bg", name, sg)
            g_all_ref[sg, m["kv_off"]:m["kv_off"] + m["rows"], :] = g

    # ---- Phase B: per (class, state field) inference + decoder + heads ----
    for name, m in META.items():
        x = dyn[name][0]
        heads = []
        for s in range(m["nsf"]):
            sg = m["sf_off"] + s
            xm = x * dyn[name][1 + s]                               # expanded local mask
            # one dot -> [ local_enc | q ]
            lq = jnp.dot(xm, W("Wlq", name, s),
                         preferred_element_type=jnp.float32) + W("blq", name, s)
            local = lq[:, :DIM_LOCAL]
            q = lq[:, DIM_LOCAL:DIM_LOCAL + DIM_K]

            # one dot -> [ k | v ] over the concatenated (all-class) object axis
            g_sg = g_all_ref[sg]                                    # (KV_ROWS, DIM_GLOBAL)
            kv = jnp.dot(g_sg, W("Wkv", name, s),
                         preferred_element_type=jnp.float32) + W("bkv", name, s)
            k = kv[:, :DIM_K]
            v = kv[:, DIM_K:DIM_K + DIM_V]

            # single-pass masked softmax attention (batch-block + self-diag mask bias)
            scores = jax.lax.dot_general(q, k, (((1,), (1,)), ((), ())),
                                         preferred_element_type=jnp.float32) * ATTN_SCALE
            scores = scores + W("attnbias", name)                   # (rows, KV_ROWS)
            mmax = scores.max(axis=-1, keepdims=True)
            e = jnp.exp(scores - mmax)
            p = e / e.sum(axis=-1, keepdims=True)
            attn = jnp.dot(p, v, preferred_element_type=jnp.float32)  # (rows, DIM_V)

            # AttributeDecoder: cat(local, attn) -> single K=32 dot, MLP, fused heads
            d_in = jnp.concatenate([local, attn], axis=-1)            # (rows, 32)
            h = _leaky_relu(jnp.dot(d_in, W("Wd1", name, s),
                                    preferred_element_type=jnp.float32) + W("bd1", name, s))
            h = _leaky_relu(jnp.dot(h, W("Wd2", name, s),
                                    preferred_element_type=jnp.float32) + W("bd2", name, s))
            heads.append(jnp.dot(h, W("Whead", name, s),
                                 preferred_element_type=jnp.float32) + W("bhead", name, s))

        cat = heads[0] if len(heads) == 1 else jnp.concatenate(heads, axis=-1)
        out_ref[0:m["rows"], m["out_lane"]:m["out_lane"] + cat.shape[-1]] = cat


# ----------------------------- parameters & masks -----------------------------------
def _linear_init(key, shape_w, shape_b, fan_in):
    k1, k2 = jax.random.split(key)
    bound = 1.0 / np.sqrt(fan_in)
    w = jax.random.uniform(k1, shape_w, jnp.float32, -bound, bound)
    b = jax.random.uniform(k2, shape_b, jnp.float32, -bound, bound)
    return w, b


def init_params(key):
    params = {}
    for ci, (name, c) in enumerate(CLASSES.items()):
        ks = jax.random.split(jax.random.fold_in(key, ci), 8)
        nsf, nf, da = c["n_statefield"], c["n_field"], c["d_attr"]
        din_enc = nf * DIM_IN + DIM_ID
        p = {}
        p["Wl"], p["bl"] = _linear_init(ks[0], (nsf, din_enc, DIM_LOCAL), (nsf, DIM_LOCAL), din_enc)
        p["Wg"], p["bg"] = _linear_init(ks[1], (NSF_TOTAL, din_enc, DIM_GLOBAL), (NSF_TOTAL, DIM_GLOBAL), din_enc)
        p["Wk"], p["bk"] = _linear_init(ks[2], (nsf, DIM_GLOBAL, DIM_K), (nsf, DIM_K), DIM_GLOBAL)
        p["Wq"], p["bq"] = _linear_init(ks[3], (nsf, DIM_LOCAL, DIM_K), (nsf, DIM_K), DIM_LOCAL)
        p["Wv"], p["bv"] = _linear_init(ks[4], (nsf, DIM_GLOBAL, DIM_V), (nsf, DIM_V), DIM_GLOBAL)
        p["Wd1"], p["bd1"] = _linear_init(ks[5], (nsf, DIM_LOCAL + DIM_V, DIM_HIDDEN), (nsf, DIM_HIDDEN),
                                          DIM_LOCAL + DIM_V)
        p["Wd2"], p["bd2"] = _linear_init(ks[6], (nsf, DIM_HIDDEN, DIM_HIDDEN), (nsf, DIM_HIDDEN), DIM_HIDDEN)
        heads = []
        for fi in range(nsf):
            kh = jax.random.split(jax.random.fold_in(ks[7], fi), 2)
            Wm, bm = _linear_init(kh[0], (1, DIM_HIDDEN, da), (1, da), DIM_HIDDEN)
            Ws, bs = _linear_init(kh[1], (1, DIM_HIDDEN, da), (1, da), DIM_HIDDEN)
            heads.append(dict(Wm=Wm, bm=bm, Ws=Ws, bs=bs))
        p["heads"] = heads
        params[name] = p
    return params


def make_masks(key):
    """Deterministic stand-ins for MaskGenerator.global_mask / local_mask."""
    kg, kl = jax.random.split(key)
    global_mask = jax.random.bernoulli(kg, 0.7, (BATCH, NSF_TOTAL, NF_TOTAL))
    local_masks = {}
    for ci, (name, c) in enumerate(CLASSES.items()):
        local_masks[name] = jax.random.bernoulli(
            jax.random.fold_in(kl, ci), 0.7, (BATCH, c["n_statefield"], c["n_field"]))
    return global_mask, local_masks


# --------------------------------- forward wrapper -----------------------------------
def _expand_mask(mask_c, noc, di):
    """(B, S, nf) 0/1 mask -> (S, B*noc, nf*Di) row/lane-expanded multiplier."""
    b, s, nf = mask_c.shape
    m = jnp.transpose(mask_c, (1, 0, 2))                            # (S, B, nf)
    m = jnp.broadcast_to(m[:, :, None, :, None], (s, b, noc, nf, di))
    return m.reshape(s, b * noc, nf * di)


def _prepare_dyn(variable_encodings, global_mask, local_masks):
    """Per-call dynamic slabs: [x_flat | lmask_exp | gmask_exp] per class (one DMA each)."""
    dyns = []
    for name, c in CLASSES.items():
        noc, nf = c["n_obj"], c["n_field"]
        x_flat = variable_encodings[name].astype(jnp.float32).reshape(BATCH * noc, nf * DIM_IN)
        fi, fj = FIELD_OFF[name]
        lm = _expand_mask(local_masks[name].astype(jnp.float32), noc, DIM_IN)
        gm = _expand_mask(global_mask[:, :, fi:fj].astype(jnp.float32), noc, DIM_IN)
        dyns.append(jnp.concatenate([x_flat[None], lm, gm], axis=0))
    return dyns


def _unpack_out(out):
    """Split the fused (OUT_ROWS, OUT_LANES) slab back into the per-class dict."""
    result = {}
    for name, c in CLASSES.items():
        m = META[name]
        da, nsf, noc = c["d_attr"], m["nsf"], c["n_obj"]
        block = out[0:m["rows"], m["out_lane"]:m["out_lane"] + nsf * 2 * da]
        block = block.reshape(BATCH, noc, nsf, 2 * da)
        cls_out = {}
        for s in range(nsf):
            cls_out[f"field_{s}"] = dict(mean=block[:, :, s, :da], scale=block[:, :, s, da:])
        result[name] = cls_out
    return result


def build_forward(offsets):
    kernel = functools.partial(_fused_inferer_kernel, offsets=offsets)

    @jax.jit
    def forward(const_slab, variable_encodings, global_mask, local_masks):
        dyns = _prepare_dyn(variable_encodings, global_mask, local_masks)
        out = pl.pallas_call(
            kernel,
            out_shape=jax.ShapeDtypeStruct((OUT_ROWS, OUT_LANES), jnp.float32),
            scratch_shapes=[pltpu.VMEM((NSF_TOTAL, KV_ROWS, DIM_GLOBAL), jnp.float32)],
        )(const_slab, *dyns)
        return _unpack_out(out)

    return forward


# ----------------------------------- main --------------------------------------------
if __name__ == "__main__":
    key = jax.random.PRNGKey(0)
    kp, km, kx = jax.random.split(key, 3)

    params = init_params(kp)
    const_slab, offsets = pack_params(params)        # static packing, done ONCE at init
    forward = build_forward(offsets)

    global_mask, local_masks = make_masks(km)
    variable_encodings = {}
    for ci, (name, c) in enumerate(CLASSES.items()):
        variable_encodings[name] = jax.random.normal(
            jax.random.fold_in(kx, ci),
            (BATCH, c["n_obj"], c["n_field"], DIM_IN), jnp.float32)

    out = forward(const_slab, variable_encodings, global_mask, local_masks)
    out = jax.block_until_ready(out)
    print("KERNEL_OK")
</pallas_src>

<mosaic_0001>
module attributes {stable_mosaic.version = 11 : i64} {
  func.func @_fused_inferer_kernel(%arg0: memref<704x32xf32, #tpu.memory_space<vmem>>, %arg1: memref<6x6x24xf32, #tpu.memory_space<vmem>>, %arg2: memref<5x4x16xf32, #tpu.memory_space<vmem>>, %arg3: memref<8x128xf32, #tpu.memory_space<vmem>>, %arg4: memref<3x16x16xf32, #tpu.memory_space<vmem>>) attributes {dimension_semantics = [], scalar_prefetch = 0 : i64, scratch_operands = 1 : i64, tpu.core_type = #tpu.core_type<tc>} {
    %cst = arith.constant 0.000000e+00 : f32
    %0 = vector.broadcast %cst : f32 to vector<3x16x16xf32>
    %c0 = arith.constant 0 : index
    %c0_0 = arith.constant 0 : index
    %c0_1 = arith.constant 0 : index
    %1 = vector.load %arg4[%c0, %c0_0, %c0_1] : memref<3x16x16xf32, #tpu.memory_space<vmem>>, vector<3x16x16xf32>
    tpu.vector_store %arg4[%c0, %c0_0, %c0_1], %0 {strides = array<i32>} : memref<3x16x16xf32, #tpu.memory_space<vmem>>, vector<3x16x16xf32>,
    %cst_2 = arith.constant 0.000000e+00 : f32
    %2 = vector.broadcast %cst_2 : f32 to vector<8x128xf32>
    %c0_3 = arith.constant 0 : index
    %c0_4 = arith.constant 0 : index
    %3 = vector.load %arg3[%c0_3, %c0_4] : memref<8x128xf32, #tpu.memory_space<vmem>>, vector<8x128xf32>
    tpu.vector_store %arg3[%c0_3, %c0_4], %2 {strides = array<i32>} : memref<8x128xf32, #tpu.memory_space<vmem>>, vector<8x128xf32>,
    %c0_5 = arith.constant 0 : index
    %c0_6 = arith.constant 0 : index
    %c0_7 = arith.constant 0 : index
    %4 = vector.load %arg1[%c0_5, %c0_6, %c0_7] : memref<6x6x24xf32, #tpu.memory_space<vmem>>, vector<1x6x24xf32>
    %5 = vector.shape_cast %4 : vector<1x6x24xf32> to vector<6x24xf32>
    %c3 = arith.constant 3 : index
    %c0_8 = arith.constant 0 : index
    %c0_9 = arith.constant 0 : index
    %6 = vector.load %arg1[%c3, %c0_8, %c0_9] : memref<6x6x24xf32, #tpu.memory_space<vmem>>, vector<1x6x24xf32>
    %7 = vector.shape_cast %6 : vector<1x6x24xf32> to vector<6x24xf32>
    %8 = arith.mulf %5, %7 : vector<6x24xf32>
    %c0_10 = arith.constant 0 : index
    %c0_11 = arith.constant 0 : index
    %9 = vector.load %arg0[%c0_10, %c0_11] : memref<704x32xf32, #tpu.memory_space<vmem>>, vector<24x16xf32>
    %cst_12 = arith.constant dense<0.000000e+00> : vector<6x16xf32>
    %10 = tpu.matmul %8, %9, %cst_12 {dimension_numbers = #tpu.dot_dimension_numbers<[1], [0], [0], [1], [0, 0, 1, 1], [], []>} : vector<6x24xf32>, vector<24x16xf32>, vector<6x16xf32> -> vector<6x16xf32>
    %c24 = arith.constant 24 : index
    %c0_13 = arith.constant 0 : index
    %11 = vector.load %arg0[%c24, %c0_13] : memref<704x32xf32, #tpu.memory_space<vmem>>, vector<1x16xf32>
    %12 = vector.broadcast %11 : vector<1x16xf32> to vector<6x16xf32>
    %13 = arith.addf %10, %12 : vector<6x16xf32>
    %c0_14 = arith.constant 0 : index
    %c0_15 = arith.constant 0 : index
    %c0_16 = arith.constant 0 : index
    %14 = vector.load %arg4[%c0_14, %c0_15, %c0_16] : memref<3x16x16xf32, #tpu.memory_space<vmem>>, vector<1x6x16xf32>
    %15 = vector.shape_cast %14 : vector<1x6x16xf32> to vector<6x16xf32>
    %16 = vector.shape_cast %13 : vector<6x16xf32> to vector<1x6x16xf32>
    tpu.vector_store %arg4[%c0_14, %c0_15, %c0_16], %16 {strides = array<i32>} : memref<3x16x16xf32, #tpu.memory_space<vmem>>, vector<1x6x16xf32>,
    %c4 = arith.constant 4 : index
    %c0_17 = arith.constant 0 : index
    %c0_18 = arith.constant 0 : index
    %17 = vector.load %arg1[%c4, %c0_17, %c0_18] : memref<6x6x24xf32, #tpu.memory_space<vmem>>, vector<1x6x24xf32>
    %18 = vector.shape_cast %17 : vector<1x6x24xf32> to vector<6x24xf32>
    %19 = arith.mulf %5, %18 : vector<6x24xf32>
    %c32 = arith.constant 32 : index
    %c0_19 = arith.constant 0 : index
    %20 = vector.load %arg0[%c32, %c0_19] : memref<704x32xf32, #tpu.memory_space<vmem>>, vector<24x16xf32>
    %cst_20 = arith.constant dense<0.000000e+00> : vector<6x16xf32>
    %21 = tpu.matmul %19, %20, %cst_20 {dimension_numbers = #tpu.dot_dimension_numbers<[1], [0], [0], [1], [0, 0, 1, 1], [], []>} : vector<6x24xf32>, vector<24x16xf32>, vector<6x16xf32> -> vector<6x16xf32>
    %c56 = arith.constant 56 : index
    %c0_21 = arith.constant 0 : index
    %22 = vector.load %arg0[%c56, %c0_21] : memref<704x32xf32, #tpu.memory_space<vmem>>, vector<1x16xf32>
    %23 = vector.broadcast %22 : vector<1x16xf32> to vector<6x16xf32>
    %24 = arith.addf %21, %23 : vector<6x16xf32>
    %c1 = arith.constant 1 : index
    %c0_22 = arith.constant 0 : index
    %c0_23 = arith.constant 0 : index
    %25 = vector.load %arg4[%c1, %c0_22, %c0_23] : memref<3x16x16xf32, #tpu.memory_space<vmem>>, vector<1x6x16xf32>
    %26 = vector.shape_cast %25 : vector<1x6x16xf32> to vector<6x16xf32>
    %27 = vector.shape_cast %24 : vector<6x16xf32> to vector<1x6x16xf32>
    tpu.vector_store %arg4[%c1, %c0_22, %c0_23], %27 {strides = array<i32>} : memref<3x16x16xf32, #tpu.memory_space<vmem>>, vector<1x6x16xf32>,
    %c5 = arith.constant 5 : index
    %c0_24 = arith.constant 0 : index
    %c0_25 = arith.constant 0 : index
    %28 = vector.load %arg1[%c5, %c0_24, %c0_25] : memref<6x6x24xf32, #tpu.memory_space<vmem>>, vector<1x6x24xf32>
    %29 = vector.shape_cast %28 : vector<1x6x24xf32> to vector<6x24xf32>
    %30 = arith.mulf %5, %29 : vector<6x24xf32>
    %c64 = arith.constant 64 : index
    %c0_26 = arith.constant 0 : index
    %31 = vector.load %arg0[%c64, %c0_26] : memref<704x32xf32, #tpu.memory_space<vmem>>, vector<24x16xf32>
    %cst_27 = arith.constant dense<0.000000e+00> : vector<6x16xf32>
    %32 = tpu.matmul %30, %31, %cst_27 {dimension_numbers = #tpu.dot_dimension_numbers<[1], [0], [0], [1], [0, 0, 1, 1], [], []>} : vector<6x24xf32>, vector<24x16xf32>, vector<6x16xf32> -> vector<6x16xf32>
    %c88 = arith.constant 88 : index
    %c0_28 = arith.constant 0 : index
    %33 = vector.load %arg0[%c88, %c0_28] : memref<704x32xf32, #tpu.memory_space<vmem>>, vector<1x16xf32>
    %34 = vector.broadcast %33 : vector<1x16xf32> to vector<6x16xf32>
    %35 = arith.addf %32, %34 : vector<6x16xf32>
    %c2 = arith.constant 2 : index
    %c0_29 = arith.constant 0 : index
    %c0_30 = arith.constant 0 : index
    %36 = vector.load %arg4[%c2, %c0_29, %c0_30] : memref<3x16x16xf32, #tpu.memory_space<vmem>>, vector<1x6x16xf32>
    %37 = vector.shape_cast %36 : vector<1x6x16xf32> to vector<6x16xf32>
    %38 = vector.shape_cast %35 : vector<6x16xf32> to vector<1x6x16xf32>
    tpu.vector_store %arg4[%c2, %c0_29, %c0_30], %38 {strides = array<i32>} : memref<3x16x16xf32, #tpu.memory_space<vmem>>, vector<1x6x16xf32>,
    %c0_31 = arith.constant 0 : index
    %c0_32 = arith.constant 0 : index
    %c0_33 = arith.constant 0 : index
    %39 = vector.load %arg2[%c0_31, %c0_32, %c0_33] : memref<5x4x16xf32, #tpu.memory_space<vmem>>, vector<1x4x16xf32>
    %40 = vector.shape_cast %39 : vector<1x4x16xf32> to vector<4x16xf32>
    %c2_34 = arith.constant 2 : index
    %c0_35 = arith.constant 0 : index
    %c0_36 = arith.constant 0 : index
    %41 = vector.load %arg2[%c2_34, %c0_35, %c0_36] : memref<5x4x16xf32, #tpu.memory_space<vmem>>, vector<1x4x16xf32>
    %42 = vector.shape_cast %41 : vector<1x4x16xf32> to vector<4x16xf32>
    %43 = arith.mulf %40, %42 : vector<4x16xf32>
    %c456 = arith.constant 456 : index
    %c0_37 = arith.constant 0 : index
    %44 = vector.load %arg0[%c456, %c0_37] : memref<704x32xf32, #tpu.memory_space<vmem>>, vector<16x16xf32>
    %cst_38 = arith.constant dense<0.000000e+00> : vector<4x16xf32>
    %45 = tpu.matmul %43, %44, %cst_38 {dimension_numbers = #tpu.dot_dimension_numbers<[1], [0], [0], [1], [0, 0, 1, 1], [], []>} : vector<4x16xf32>, vector<16x16xf32>, vector<4x16xf32> -> vector<4x16xf32>
    %c472 = arith.constant 472 : index
    %c0_39 = arith.constant 0 : index
    %46 = vector.load %arg0[%c472, %c0_39] : memref<704x32xf32, #tpu.memory_space<vmem>>, vector<1x16xf32>
    %47 = vector.broadcast %46 : vector<1x16xf32> to vector<4x16xf32>
    %48 = arith.addf %45, %47 : vector<4x16xf32>
    %c0_40 = arith.constant 0 : index
    %c8 = arith.constant 8 : index
    %c0_41 = arith.constant 0 : index
    %49 = vector.load %arg4[%c0_40, %c8, %c0_41] : memref<3x16x16xf32, #tpu.memory_space<vmem>>, vector<1x4x16xf32>
    %50 = vector.shape_cast %49 : vector<1x4x16xf32> to vector<4x16xf32>
    %51 = vector.shape_cast %48 : vector<4x16xf32> to vector<1x4x16xf32>
    tpu.vector_store %arg4[%c0_40, %c8, %c0_41], %51 {strides = array<i32>} : memref<3x16x16xf32, #tpu.memory_space<vmem>>, vector<1x4x16xf32>,
    %c3_42 = arith.constant 3 : index
    %c0_43 = arith.constant 0 : index
    %c0_44 = arith.constant 0 : index
    %52 = vector.load %arg2[%c3_42, %c0_43, %c0_44] : memref<5x4x16xf32, #tpu.memory_space<vmem>>, vector<1x4x16xf32>
    %53 = vector.shape_cast %52 : vector<1x4x16xf32> to vector<4x16xf32>
    %54 = arith.mulf %40, %53 : vector<4x16xf32>
    %c480 = arith.constant 480 : index
    %c0_45 = arith.constant 0 : index
    %55 = vector.load %arg0[%c480, %c0_45] : memref<704x32xf32, #tpu.memory_space<vmem>>, vector<16x16xf32>
    %cst_46 = arith.constant dense<0.000000e+00> : vector<4x16xf32>
    %56 = tpu.matmul %54, %55, %cst_46 {dimension_numbers = #tpu.dot_dimension_numbers<[1], [0], [0], [1], [0, 0, 1, 1], [], []>} : vector<4x16xf32>, vector<16x16xf32>, vector<4x16xf32> -> vector<4x16xf32>
    %c496 = arith.constant 496 : index
    %c0_47 = arith.constant 0 : index
    %57 = vector.load %arg0[%c496, %c0_47] : memref<704x32xf32, #tpu.memory_space<vmem>>, vector<1x16xf32>
    %58 = vector.broadcast %57 : vector<1x16xf32> to vector<4x16xf32>
    %59 = arith.addf %56, %58 : vector<4x16xf32>
    %c1_48 = arith.constant 1 : index
    %c8_49 = arith.constant 8 : index
    %c0_50 = arith.constant 0 : index
    %60 = vector.load %arg4[%c1_48, %c8_49, %c0_50] : memref<3x16x16xf32, #tpu.memory_space<vmem>>, vector<1x4x16xf32>
    %61 = vector.shape_cast %60 : vector<1x4x16xf32> to vector<4x16xf32>
    %62 = vector.shape_cast %59 : vector<4x16xf32> to vector<1x4x16xf32>
    tpu.vector_store %arg4[%c1_48, %c8_49, %c0_50], %62 {strides = array<i32>} : memref<3x16x16xf32, #tpu.memory_space<vmem>>, vector<1x4x16xf32>,
    %c4_51 = arith.constant 4 : index
    %c0_52 = arith.constant 0 : index
    %c0_53 = arith.constant 0 : index
    %63 = vector.load %arg2[%c4_51, %c0_52, %c0_53] : memref<5x4x16xf32, #tpu.memory_space<vmem>>, vector<1x4x16xf32>
    %64 = vector.shape_cast %63 : vector<1x4x16xf32> to vector<4x16xf32>
    %65 = arith.mulf %40, %64 : vector<4x16xf32>
    %c504 = arith.constant 504 : index
    %c0_54 = arith.constant 0 : index
    %66 = vector.load %arg0[%c504, %c0_54] : memref<704x32xf32, #tpu.memory_space<vmem>>, vector<16x16xf32>
    %cst_55 = arith.constant dense<0.000000e+00> : vector<4x16xf32>
    %67 = tpu.matmul %65, %66, %cst_55 {dimension_numbers = #tpu.dot_dimension_numbers<[1], [0], [0], [1], [0, 0, 1, 1], [], []>} : vector<4x16xf32>, vector<16x16xf32>, vector<4x16xf32> -> vector<4x16xf32>
    %c520 = arith.constant 520 : index
    %c0_56 = arith.constant 0 : index
    %68 = vector.load %arg0[%c520, %c0_56] : memref<704x32xf32, #tpu.memory_space<vmem>>, vector<1x16xf32>
    %69 = vector.broadcast %68 : vector<1x16xf32> to vector<4x16xf32>
    %70 = arith.addf %67, %69 : vector<4x16xf32>
    %c2_57 = arith.constant 2 : index
    %c8_58 = arith.constant 8 : index
    %c0_59 = arith.constant 0 : index
    %71 = vector.load %arg4[%c2_57, %c8_58, %c0_59] : memref<3x16x16xf32, #tpu.memory_space<vmem>>, vector<1x4x16xf32>
    %72 = vector.shape_cast %71 : vector<1x4x16xf32> to vector<4x16xf32>
    %73 = vector.shape_cast %70 : vector<4x16xf32> to vector<1x4x16xf32>
    tpu.vector_store %arg4[%c2_57, %c8_58, %c0_59], %73 {strides = array<i32>} : memref<3x16x16xf32, #tpu.memory_space<vmem>>, vector<1x4x16xf32>,
    %c0_60 = arith.constant 0 : index
    %c0_61 = arith.constant 0 : index
    %c0_62 = arith.constant 0 : index
    %74 = vector.load %arg1[%c0_60, %c0_61, %c0_62] : memref<6x6x24xf32, #tpu.memory_space<vmem>>, vector<1x6x24xf32>
    %75 = vector.shape_cast %74 : vector<1x6x24xf32> to vector<6x24xf32>
    %c1_63 = arith.constant 1 : index
    %c0_64 = arith.constant 0 : index
    %c0_65 = arith.constant 0 : index
    %76 = vector.load %arg1[%c1_63, %c0_64, %c0_65] : memref<6x6x24xf32, #tpu.memory_space<vmem>>, vector<1x6x24xf32>
    %77 = vector.shape_cast %76 : vector<1x6x24xf32> to vector<6x24xf32>
    %78 = arith.mulf %75, %77 : vector<6x24xf32>
    %c96 = arith.constant 96 : index
    %c0_66 = arith.constant 0 : index
    %79 = vector.load %arg0[%c96, %c0_66] : memref<704x32xf32, #tpu.memory_space<vmem>>, vector<24x32xf32>
    %cst_67 = arith.constant dense<0.000000e+00> : vector<6x32xf32>
    %80 = tpu.matmul %78, %79, %cst_67 {dimension_numbers = #tpu.dot_dimension_numbers<[1], [0], [0], [1], [0, 0, 1, 1], [], []>} : vector<6x24xf32>, vector<24x32xf32>, vector<6x32xf32> -> vector<6x32xf32>
    %c120 = arith.constant 120 : index
    %c0_68 = arith.constant 0 : index
    %81 = vector.load %arg0[%c120, %c0_68] : memref<704x32xf32, #tpu.memory_space<vmem>>, vector<1x32xf32>
    %82 = vector.broadcast %81 : vector<1x32xf32> to vector<6x32xf32>
    %83 = arith.addf %80, %82 : vector<6x32xf32>
    %84 = vector.extract_strided_slice %83 {offsets = [0, 0], sizes = [6, 16], strides = [1, 1]} : vector<6x32xf32> to vector<6x16xf32>
    %85 = vector.extract_strided_slice %83 {offsets = [0, 16], sizes = [6, 16], strides = [1, 1]} : vector<6x32xf32> to vector<6x16xf32>
    %c0_69 = arith.constant 0 : index
    %c0_70 = arith.constant 0 : index
    %c0_71 = arith.constant 0 : index
    %86 = vector.load %arg4[%c0_69, %c0_70, %c0_71] : memref<3x16x16xf32, #tpu.memory_space<vmem>>, vector<1x16x16xf32>
    %87 = vector.shape_cast %86 : vector<1x16x16xf32> to vector<16x16xf32>
    %c128 = arith.constant 128 : index
    %c0_72 = arith.constant 0 : index
    %88 = vector.load %arg0[%c128, %c0_72] : memref<704x32xf32, #tpu.memory_space<vmem>>, vector<16x32xf32>
    %cst_73 = arith.constant dense<0.000000e+00> : vector<16x32xf32>
    %89 = tpu.matmul %87, %88, %cst_73 {dimension_numbers = #tpu.dot_dimension_numbers<[1], [0], [0], [1], [0, 0, 1, 1], [], []>} : vector<16x16xf32>, vector<16x32xf32>, vector<16x32xf32> -> vector<16x32xf32>
    %c144 = arith.constant 144 : index
    %c0_74 = arith.constant 0 : index
    %90 = vector.load %arg0[%c144, %c0_74] : memref<704x32xf32, #tpu.memory_space<vmem>>, vector<1x32xf32>
    %91 = vector.broadcast %90 : vector<1x32xf32> to vector<16x32xf32>
    %92 = arith.addf %89, %91 : vector<16x32xf32>
    %93 = vector.extract_strided_slice %92 {offsets = [0, 0], sizes = [16, 16], strides = [1, 1]} : vector<16x32xf32> to vector<16x16xf32>
    %94 = vector.extract_strided_slice %92 {offsets = [0, 16], sizes = [16, 16], strides = [1, 1]} : vector<16x32xf32> to vector<16x16xf32>
    %cst_75 = arith.constant dense<0.000000e+00> : vector<6x16xf32>
    %95 = tpu.matmul %85, %93, %cst_75 {dimension_numbers = #tpu.dot_dimension_numbers<[1], [1], [0], [0], [0, 0, 1, 0], [], []>} : vector<6x16xf32>, vector<16x16xf32>, vector<6x16xf32> -> vector<6x16xf32>
    %cst_76 = arith.constant 2.500000e-01 : f32
    %96 = vector.broadcast %cst_76 : f32 to vector<6x16xf32>
    %97 = arith.mulf %95, %96 : vector<6x16xf32>
    %c448 = arith.constant 448 : index
    %c0_77 = arith.constant 0 : index
    %98 = vector.load %arg0[%c448, %c0_77] : memref<704x32xf32, #tpu.memory_space<vmem>>, vector<6x16xf32>
    %99 = arith.addf %97, %98 : vector<6x16xf32>
    %cst_78 = arith.constant dense<0xFF800000> : vector<6xf32>
    %100 = vector.multi_reduction <maximumf>, %99, %cst_78 [1] : vector<6x16xf32> to vector<6xf32>
    %101 = vector.shape_cast %100 : vector<6xf32> to vector<6x1xf32>
    %102 = vector.broadcast %101 : vector<6x1xf32> to vector<6x16xf32>
    %103 = arith.subf %99, %102 : vector<6x16xf32>
    %104 = math.exp %103 : vector<6x16xf32>
    %cst_79 = arith.constant dense<0.000000e+00> : vector<6xf32>
    %105 = vector.multi_reduction <add>, %104, %cst_79 [1] : vector<6x16xf32> to vector<6xf32>
    %106 = vector.shape_cast %105 : vector<6xf32> to vector<6x1xf32>
    %107 = vector.broadcast %106 : vector<6x1xf32> to vector<6x16xf32>
    %108 = arith.divf %104, %107 : vector<6x16xf32>
    %cst_80 = arith.constant dense<0.000000e+00> : vector<6x16xf32>
    %109 = tpu.matmul %108, %94, %cst_80 {dimension_numbers = #tpu.dot_dimension_numbers<[1], [0], [0], [1], [0, 0, 1, 1], [], []>} : vector<6x16xf32>, vector<16x16xf32>, vector<6x16xf32> -> vector<6x16xf32>
    %110 = tpu.concatenate %84, %109 in 1 : vector<6x16xf32>, vector<6x16xf32> -> vector<6x32xf32>
    %c152 = arith.constant 152 : index
    %c0_81 = arith.constant 0 : index
    %111 = vector.load %arg0[%c152, %c0_81] : memref<704x32xf32, #tpu.memory_space<vmem>>, vector<32x32xf32>
    %cst_82 = arith.constant dense<0.000000e+00> : vector<6x32xf32>
    %112 = tpu.matmul %110, %111, %cst_82 {dimension_numbers = #tpu.dot_dimension_numbers<[1], [0], [0], [1], [0, 0, 1, 1], [], []>} : vector<6x32xf32>, vector<32x32xf32>, vector<6x32xf32> -> vector<6x32xf32>
    %c184 = arith.constant 184 : index
    %c0_83 = arith.constant 0 : index
    %113 = vector.load %arg0[%c184, %c0_83] : memref<704x32xf32, #tpu.memory_space<vmem>>, vector<1x32xf32>
    %114 = vector.broadcast %113 : vector<1x32xf32> to vector<6x32xf32>
    %115 = arith.addf %112, %114 : vector<6x32xf32>
    %cst_84 = arith.constant 0.000000e+00 : f32
    %116 = vector.broadcast %cst_84 : f32 to vector<6x32xf32>
    %117 = arith.cmpf oge, %115, %116 : vector<6x32xf32>
    %cst_85 = arith.constant 0.00999999977 : f32
    %118 = vector.broadcast %cst_85 : f32 to vector<6x32xf32>
    %119 = arith.mulf %118, %115 : vector<6x32xf32>
    %120 = arith.select %117, %115, %119 : vector<6x32xi1>, vector<6x32xf32>
    %c192 = arith.constant 192 : index
    %c0_86 = arith.constant 0 : index
    %121 = vector.load %arg0[%c192, %c0_86] : memref<704x32xf32, #tpu.memory_space<vmem>>, vector<32x32xf32>
    %cst_87 = arith.constant dense<0.000000e+00> : vector<6x32xf32>
    %122 = tpu.matmul %120, %121, %cst_87 {dimension_numbers = #tpu.dot_dimension_numbers<[1], [0], [0], [1], [0, 0, 1, 1], [], []>} : vector<6x32xf32>, vector<32x32xf32>, vector<6x32xf32> -> vector<6x32xf32>
    %c224 = arith.constant 224 : index
    %c0_88 = arith.constant 0 : index
    %123 = vector.load %arg0[%c224, %c0_88] : memref<704x32xf32, #tpu.memory_space<vmem>>, vector<1x32xf32>
    %124 = vector.broadcast %123 : vector<1x32xf32> to vector<6x32xf32>
    %125 = arith.addf %122, %124 : vector<6x32xf32>
    %cst_89 = arith.constant 0.000000e+00 : f32
    %126 = vector.broadcast %cst_89 : f32 to vector<6x32xf32>
    %127 = arith.cmpf oge, %125, %126 : vector<6x32xf32>
    %cst_90 = arith.constant 0.00999999977 : f32
    %128 = vector.broadcast %cst_90 : f32 to vector<6x32xf32>
    %129 = arith.mulf %128, %125 : vector<6x32xf32>
    %130 = arith.select %127, %125, %129 : vector<6x32xi1>, vector<6x32xf32>
    %c232 = arith.constant 232 : index
    %c0_91 = arith.constant 0 : index
    %131 = vector.load %arg0[%c232, %c0_91] : memref<704x32xf32, #tpu.memory_space<vmem>>, vector<32x8xf32>
    %cst_92 = arith.constant dense<0.000000e+00> : vector<6x8xf32>
    %132 = tpu.matmul %130, %131, %cst_92 {dimension_numbers = #tpu.dot_dimension_numbers<[1], [0], [0], [1], [0, 0, 1, 1], [], []>} : vector<6x32xf32>, vector<32x8xf32>, vector<6x8xf32> -> vector<6x8xf32>
    %c264 = arith.constant 264 : index
    %c0_93 = arith.constant 0 : index
    %133 = vector.load %arg0[%c264, %c0_93] : memref<704x32xf32, #tpu.memory_space<vmem>>, vector<1x8xf32>
    %134 = vector.broadcast %133 : vector<1x8xf32> to vector<6x8xf32>
    %135 = arith.addf %132, %134 : vector<6x8xf32>
    %c2_94 = arith.constant 2 : index
    %c0_95 = arith.constant 0 : index
    %c0_96 = arith.constant 0 : index
    %136 = vector.load %arg1[%c2_94, %c0_95, %c0_96] : memref<6x6x24xf32, #tpu.memory_space<vmem>>, vector<1x6x24xf32>
    %137 = vector.shape_cast %136 : vector<1x6x24xf32> to vector<6x24xf32>
    %138 = arith.mulf %75, %137 : vector<6x24xf32>
    %c272 = arith.constant 272 : index
    %c0_97 = arith.constant 0 : index
    %139 = vector.load %arg0[%c272, %c0_97] : memref<704x32xf32, #tpu.memory_space<vmem>>, vector<24x32xf32>
    %cst_98 = arith.constant dense<0.000000e+00> : vector<6x32xf32>
    %140 = tpu.matmul %138, %139, %cst_98 {dimension_numbers = #tpu.dot_dimension_numbers<[1], [0], [0], [1], [0, 0, 1, 1], [], []>} : vector<6x24xf32>, vector<24x32xf32>, vector<6x32xf32> -> vector<6x32xf32>
    %c296 = arith.constant 296 : index
    %c0_99 = arith.constant 0 : index
    %141 = vector.load %arg0[%c296, %c0_99] : memref<704x32xf32, #tpu.memory_space<vmem>>, vector<1x32xf32>
    %142 = vector.broadcast %141 : vector<1x32xf32> to vector<6x32xf32>
    %143 = arith.addf %140, %142 : vector<6x32xf32>
    %144 = vector.extract_strided_slice %143 {offsets = [0, 0], sizes = [6, 16], strides = [1, 1]} : vector<6x32xf32> to vector<6x16xf32>
    %145 = vector.extract_strided_slice %143 {offsets = [0, 16], sizes = [6, 16], strides = [1, 1]} : vector<6x32xf32> to vector<6x16xf32>
    %c1_100 = arith.constant 1 : index
    %c0_101 = arith.constant 0 : index
    %c0_102 = arith.constant 0 : index
    %146 = vector.load %arg4[%c1_100, %c0_101, %c0_102] : memref<3x16x16xf32, #tpu.memory_space<vmem>>, vector<1x16x16xf32>
    %147 = vector.shape_cast %146 : vector<1x16x16xf32> to vector<16x16xf32>
    %c304 = arith.constant 304 : index
    %c0_103 = arith.constant 0 : index
    %148 = vector.load %arg0[%c304, %c0_103] : memref<704x32xf32, #tpu.memory_space<vmem>>, vector<16x32xf32>
    %cst_104 = arith.constant dense<0.000000e+00> : vector<16x32xf32>
    %149 = tpu.matmul %147, %148, %cst_104 {dimension_numbers = #tpu.dot_dimension_numbers<[1], [0], [0], [1], [0, 0, 1, 1], [], []>} : vector<16x16xf32>, vector<16x32xf32>, vector<16x32xf32> -> vector<16x32xf32>
    %c320 = arith.constant 320 : index
    %c0_105 = arith.constant 0 : index
    %150 = vector.load %arg0[%c320, %c0_105] : memref<704x32xf32, #tpu.memory_space<vmem>>, vector<1x32xf32>
    %151 = vector.broadcast %150 : vector<1x32xf32> to vector<16x32xf32>
    %152 = arith.addf %149, %151 : vector<16x32xf32>
    %153 = vector.extract_strided_slice %152 {offsets = [0, 0], sizes = [16, 16], strides = [1, 1]} : vector<16x32xf32> to vector<16x16xf32>
    %154 = vector.extract_strided_slice %152 {offsets = [0, 16], sizes = [16, 16], strides = [1, 1]} : vector<16x32xf32> to vector<16x16xf32>
    %cst_106 = arith.constant dense<0.000000e+00> : vector<6x16xf32>
    %155 = tpu.matmul %145, %153, %cst_106 {dimension_numbers = #tpu.dot_dimension_numbers<[1], [1], [0], [0], [0, 0, 1, 0], [], []>} : vector<6x16xf32>, vector<16x16xf32>, vector<6x16xf32> -> vector<6x16xf32>
    %cst_107 = arith.constant 2.500000e-01 : f32
    %156 = vector.broadcast %cst_107 : f32 to vector<6x16xf32>
    %157 = arith.mulf %155, %156 : vector<6x16xf32>
    %c448_108 = arith.constant 448 : index
    %c0_109 = arith.constant 0 : index
    %158 = vector.load %arg0[%c448_108, %c0_109] : memref<704x32xf32, #tpu.memory_space<vmem>>, vector<6x16xf32>
    %159 = arith.addf %157, %158 : vector<6x16xf32>
    %cst_110 = arith.constant dense<0xFF800000> : vector<6xf32>
    %160 = vector.multi_reduction <maximumf>, %159, %cst_110 [1] : vector<6x16xf32> to vector<6xf32>
    %161 = vector.shape_cast %160 : vector<6xf32> to vector<6x1xf32>
    %162 = vector.broadcast %161 : vector<6x1xf32> to vector<6x16xf32>
    %163 = arith.subf %159, %162 : vector<6x16xf32>
    %164 = math.exp %163 : vector<6x16xf32>
    %cst_111 = arith.constant dense<0.000000e+00> : vector<6xf32>
    %165 = vector.multi_reduction <add>, %164, %cst_111 [1] : vector<6x16xf32> to vector<6xf32>
    %166 = vector.shape_cast %165 : vector<6xf32> to vector<6x1xf32>
    %167 = vector.broadcast %166 : vector<6x1xf32> to vector<6x16xf32>
    %168 = arith.divf %164, %167 : vector<6x16xf32>
    %cst_112 = arith.constant dense<0.000000e+00> : vector<6x16xf32>
    %169 = tpu.matmul %168, %154, %cst_112 {dimension_numbers = #tpu.dot_dimension_numbers<[1], [0], [0], [1], [0, 0, 1, 1], [], []>} : vector<6x16xf32>, vector<16x16xf32>, vector<6x16xf32> -> vector<6x16xf32>
    %170 = tpu.concatenate %144, %169 in 1 : vector<6x16xf32>, vector<6x16xf32> -> vector<6x32xf32>
    %c328 = arith.constant 328 : index
    %c0_113 = arith.constant 0 : index
    %171 = vector.load %arg0[%c328, %c0_113] : memref<704x32xf32, #tpu.memory_space<vmem>>, vector<32x32xf32>
    %cst_114 = arith.constant dense<0.000000e+00> : vector<6x32xf32>
    %172 = tpu.matmul %170, %171, %cst_114 {dimension_numbers = #tpu.dot_dimension_numbers<[1], [0], [0], [1], [0, 0, 1, 1], [], []>} : vector<6x32xf32>, vector<32x32xf32>, vector<6x32xf32> -> vector<6x32xf32>
    %c360 = arith.constant 360 : index
    %c0_115 = arith.constant 0 : index
    %173 = vector.load %arg0[%c360, %c0_115] : memref<704x32xf32, #tpu.memory_space<vmem>>, vector<1x32xf32>
    %174 = vector.broadcast %173 : vector<1x32xf32> to vector<6x32xf32>
    %175 = arith.addf %172, %174 : vector<6x32xf32>
    %cst_116 = arith.constant 0.000000e+00 : f32
    %176 = vector.broadcast %cst_116 : f32 to vector<6x32xf32>
    %177 = arith.cmpf oge, %175, %176 : vector<6x32xf32>
    %cst_117 = arith.constant 0.00999999977 : f32
    %178 = vector.broadcast %cst_117 : f32 to vector<6x32xf32>
    %179 = arith.mulf %178, %175 : vector<6x32xf32>
    %180 = arith.select %177, %175, %179 : vector<6x32xi1>, vector<6x32xf32>
    %c368 = arith.constant 368 : index
    %c0_118 = arith.constant 0 : index
    %181 = vector.load %arg0[%c368, %c0_118] : memref<704x32xf32, #tpu.memory_space<vmem>>, vector<32x32xf32>
    %cst_119 = arith.constant dense<0.000000e+00> : vector<6x32xf32>
    %182 = tpu.matmul %180, %181, %cst_119 {dimension_numbers = #tpu.dot_dimension_numbers<[1], [0], [0], [1], [0, 0, 1, 1], [], []>} : vector<6x32xf32>, vector<32x32xf32>, vector<6x32xf32> -> vector<6x32xf32>
    %c400 = arith.constant 400 : index
    %c0_120 = arith.constant 0 : index
    %183 = vector.load %arg0[%c400, %c0_120] : memref<704x32xf32, #tpu.memory_space<vmem>>, vector<1x32xf32>
    %184 = vector.broadcast %183 : vector<1x32xf32> to vector<6x32xf32>
    %185 = arith.addf %182, %184 : vector<6x32xf32>
    %cst_121 = arith.constant 0.000000e+00 : f32
    %186 = vector.broadcast %cst_121 : f32 to vector<6x32xf32>
    %187 = arith.cmpf oge, %185, %186 : vector<6x32xf32>
    %cst_122 = arith.constant 0.00999999977 : f32
    %188 = vector.broadcast %cst_122 : f32 to vector<6x32xf32>
    %189 = arith.mulf %188, %185 : vector<6x32xf32>
    %190 = arith.select %187, %185, %189 : vector<6x32xi1>, vector<6x32xf32>
    %c408 = arith.constant 408 : index
    %c0_123 = arith.constant 0 : index
    %191 = vector.load %arg0[%c408, %c0_123] : memref<704x32xf32, #tpu.memory_space<vmem>>, vector<32x8xf32>
    %cst_124 = arith.constant dense<0.000000e+00> : vector<6x8xf32>
    %192 = tpu.matmul %190, %191, %cst_124 {dimension_numbers = #tpu.dot_dimension_numbers<[1], [0], [0], [1], [0, 0, 1, 1], [], []>} : vector<6x32xf32>, vector<32x8xf32>, vector<6x8xf32> -> vector<6x8xf32>
    %c440 = arith.constant 440 : index
    %c0_125 = arith.constant 0 : index
    %193 = vector.load %arg0[%c440, %c0_125] : memref<704x32xf32, #tpu.memory_space<vmem>>, vector<1x8xf32>
    %194 = vector.broadcast %193 : vector<1x8xf32> to vector<6x8xf32>
    %195 = arith.addf %192, %194 : vector<6x8xf32>
    %196 = tpu.concatenate %135, %195 in 1 : vector<6x8xf32>, vector<6x8xf32> -> vector<6x16xf32>
    %c0_126 = arith.constant 0 : index
    %c0_127 = arith.constant 0 : index
    %197 = vector.load %arg3[%c0_126, %c0_127] : memref<8x128xf32, #tpu.memory_space<vmem>>, vector<6x16xf32>
    tpu.vector_store %arg3[%c0_126, %c0_127], %196 {strides = array<i32>} : memref<8x128xf32, #tpu.memory_space<vmem>>, vector<6x16xf32>,
    %c0_128 = arith.constant 0 : index
    %c0_129 = arith.constant 0 : index
    %c0_130 = arith.constant 0 : index
    %198 = vector.load %arg2[%c0_128, %c0_129, %c0_130] : memref<5x4x16xf32, #tpu.memory_space<vmem>>, vector<1x4x16xf32>
    %199 = vector.shape_cast %198 : vector<1x4x16xf32> to vector<4x16xf32>
    %c1_131 = arith.constant 1 : index
    %c0_132 = arith.constant 0 : index
    %c0_133 = arith.constant 0 : index
    %200 = vector.load %arg2[%c1_131, %c0_132, %c0_133] : memref<5x4x16xf32, #tpu.memory_space<vmem>>, vector<1x4x16xf32>
    %201 = vector.shape_cast %200 : vector<1x4x16xf32> to vector<4x16xf32>
    %202 = arith.mulf %199, %201 : vector<4x16xf32>
    %c528 = arith.constant 528 : index
    %c0_134 = arith.constant 0 : index
    %203 = vector.load %arg0[%c528, %c0_134] : memref<704x32xf32, #tpu.memory_space<vmem>>, vector<16x32xf32>
    %cst_135 = arith.constant dense<0.000000e+00> : vector<4x32xf32>
    %204 = tpu.matmul %202, %203, %cst_135 {dimension_numbers = #tpu.dot_dimension_numbers<[1], [0], [0], [1], [0, 0, 1, 1], [], []>} : vector<4x16xf32>, vector<16x32xf32>, vector<4x32xf32> -> vector<4x32xf32>
    %c544 = arith.constant 544 : index
    %c0_136 = arith.constant 0 : index
    %205 = vector.load %arg0[%c544, %c0_136] : memref<704x32xf32, #tpu.memory_space<vmem>>, vector<1x32xf32>
    %206 = vector.broadcast %205 : vector<1x32xf32> to vector<4x32xf32>
    %207 = arith.addf %204, %206 : vector<4x32xf32>
    %208 = vector.extract_strided_slice %207 {offsets = [0, 0], sizes = [4, 16], strides = [1, 1]} : vector<4x32xf32> to vector<4x16xf32>
    %209 = vector.extract_strided_slice %207 {offsets = [0, 16], sizes = [4, 16], strides = [1, 1]} : vector<4x32xf32> to vector<4x16xf32>
    %c2_137 = arith.constant 2 : index
    %c0_138 = arith.constant 0 : index
    %c0_139 = arith.constant 0 : index
    %210 = vector.load %arg4[%c2_137, %c0_138, %c0_139] : memref<3x16x16xf32, #tpu.memory_space<vmem>>, vector<1x16x16xf32>
    %211 = vector.shape_cast %210 : vector<1x16x16xf32> to vector<16x16xf32>
    %c552 = arith.constant 552 : index
    %c0_140 = arith.constant 0 : index
    %212 = vector.load %arg0[%c552, %c0_140] : memref<704x32xf32, #tpu.memory_space<vmem>>, vector<16x32xf32>
    %cst_141 = arith.constant dense<0.000000e+00> : vector<16x32xf32>
    %213 = tpu.matmul %211, %212, %cst_141 {dimension_numbers = #tpu.dot_dimension_numbers<[1], [0], [0], [1], [0, 0, 1, 1], [], []>} : vector<16x16xf32>, vector<16x32xf32>, vector<16x32xf32> -> vector<16x32xf32>
    %c568 = arith.constant 568 : index
    %c0_142 = arith.constant 0 : index
    %214 = vector.load %arg0[%c568, %c0_142] : memref<704x32xf32, #tpu.memory_space<vmem>>, vector<1x32xf32>
    %215 = vector.broadcast %214 : vector<1x32xf32> to vector<16x32xf32>
    %216 = arith.addf %213, %215 : vector<16x32xf32>
    %217 = vector.extract_strided_slice %216 {offsets = [0, 0], sizes = [16, 16], strides = [1, 1]} : vector<16x32xf32> to vector<16x16xf32>
    %218 = vector.extract_strided_slice %216 {offsets = [0, 16], sizes = [16, 16], strides = [1, 1]} : vector<16x32xf32> to vector<16x16xf32>
    %cst_143 = arith.constant dense<0.000000e+00> : vector<4x16xf32>
    %219 = tpu.matmul %209, %217, %cst_143 {dimension_numbers = #tpu.dot_dimension_numbers<[1], [1], [0], [0], [0, 0, 1, 0], [], []>} : vector<4x16xf32>, vector<16x16xf32>, vector<4x16xf32> -> vector<4x16xf32>
    %cst_144 = arith.constant 2.500000e-01 : f32
    %220 = vector.broadcast %cst_144 : f32 to vector<4x16xf32>
    %221 = arith.mulf %219, %220 : vector<4x16xf32>
    %c696 = arith.constant 696 : index
    %c0_145 = arith.constant 0 : index
    %222 = vector.load %arg0[%c696, %c0_145] : memref<704x32xf32, #tpu.memory_space<vmem>>, vector<4x16xf32>
    %223 = arith.addf %221, %222 : vector<4x16xf32>
    %cst_146 = arith.constant dense<0xFF800000> : vector<4xf32>
    %224 = vector.multi_reduction <maximumf>, %223, %cst_146 [1] : vector<4x16xf32> to vector<4xf32>
    %225 = vector.shape_cast %224 : vector<4xf32> to vector<4x1xf32>
    %226 = vector.broadcast %225 : vector<4x1xf32> to vector<4x16xf32>
    %227 = arith.subf %223, %226 : vector<4x16xf32>
    %228 = math.exp %227 : vector<4x16xf32>
    %cst_147 = arith.constant dense<0.000000e+00> : vector<4xf32>
    %229 = vector.multi_reduction <add>, %228, %cst_147 [1] : vector<4x16xf32> to vector<4xf32>
    %230 = vector.shape_cast %229 : vector<4xf32> to vector<4x1xf32>
    %231 = vector.broadcast %230 : vector<4x1xf32> to vector<4x16xf32>
    %232 = arith.divf %228, %231 : vector<4x16xf32>
    %cst_148 = arith.constant dense<0.000000e+00> : vector<4x16xf32>
    %233 = tpu.matmul %232, %218, %cst_148 {dimension_numbers = #tpu.dot_dimension_numbers<[1], [0], [0], [1], [0, 0, 1, 1], [], []>} : vector<4x16xf32>, vector<16x16xf32>, vector<4x16xf32> -> vector<4x16xf32>
    %234 = tpu.concatenate %208, %233 in 1 : vector<4x16xf32>, vector<4x16xf32> -> vector<4x32xf32>
    %c576 = arith.constant 576 : index
    %c0_149 = arith.constant 0 : index
    %235 = vector.load %arg0[%c576, %c0_149] : memref<704x32xf32, #tpu.memory_space<vmem>>, vector<32x32xf32>
    %cst_150 = arith.constant dense<0.000000e+00> : vector<4x32xf32>
    %236 = tpu.matmul %234, %235, %cst_150 {dimension_numbers = #tpu.dot_dimension_numbers<[1], [0], [0], [1], [0, 0, 1, 1], [], []>} : vector<4x32xf32>, vector<32x32xf32>, vector<4x32xf32> -> vector<4x32xf32>
    %c608 = arith.constant 608 : index
    %c0_151 = arith.constant 0 : index
    %237 = vector.load %arg0[%c608, %c0_151] : memref<704x32xf32, #tpu.memory_space<vmem>>, vector<1x32xf32>
    %238 = vector.broadcast %237 : vector<1x32xf32> to vector<4x32xf32>
    %239 = arith.addf %236, %238 : vector<4x32xf32>
    %cst_152 = arith.constant 0.000000e+00 : f32
    %240 = vector.broadcast %cst_152 : f32 to vector<4x32xf32>
    %241 = arith.cmpf oge, %239, %240 : vector<4x32xf32>
    %cst_153 = arith.constant 0.00999999977 : f32
    %242 = vector.broadcast %cst_153 : f32 to vector<4x32xf32>
    %243 = arith.mulf %242, %239 : vector<4x32xf32>
    %244 = arith.select %241, %239, %243 : vector<4x32xi1>, vector<4x32xf32>
    %c616 = arith.constant 616 : index
    %c0_154 = arith.constant 0 : index
    %245 = vector.load %arg0[%c616, %c0_154] : memref<704x32xf32, #tpu.memory_space<vmem>>, vector<32x32xf32>
    %cst_155 = arith.constant dense<0.000000e+00> : vector<4x32xf32>
    %246 = tpu.matmul %244, %245, %cst_155 {dimension_numbers = #tpu.dot_dimension_numbers<[1], [0], [0], [1], [0, 0, 1, 1], [], []>} : vector<4x32xf32>, vector<32x32xf32>, vector<4x32xf32> -> vector<4x32xf32>
    %c648 = arith.constant 648 : index
    %c0_156 = arith.constant 0 : index
    %247 = vector.load %arg0[%c648, %c0_156] : memref<704x32xf32, #tpu.memory_space<vmem>>, vector<1x32xf32>
    %248 = vector.broadcast %247 : vector<1x32xf32> to vector<4x32xf32>
    %249 = arith.addf %246, %248 : vector<4x32xf32>
    %cst_157 = arith.constant 0.000000e+00 : f32
    %250 = vector.broadcast %cst_157 : f32 to vector<4x32xf32>
    %251 = arith.cmpf oge, %249, %250 : vector<4x32xf32>
    %cst_158 = arith.constant 0.00999999977 : f32
    %252 = vector.broadcast %cst_158 : f32 to vector<4x32xf32>
    %253 = arith.mulf %252, %249 : vector<4x32xf32>
    %254 = arith.select %251, %249, %253 : vector<4x32xi1>, vector<4x32xf32>
    %c656 = arith.constant 656 : index
    %c0_159 = arith.constant 0 : index
    %255 = vector.load %arg0[%c656, %c0_159] : memref<704x32xf32, #tpu.memory_space<vmem>>, vector<32x8xf32>
    %cst_160 = arith.constant dense<0.000000e+00> : vector<4x8xf32>
    %256 = tpu.matmul %254, %255, %cst_160 {dimension_numbers = #tpu.dot_dimension_numbers<[1], [0], [0], [1], [0, 0, 1, 1], [], []>} : vector<4x32xf32>, vector<32x8xf32>, vector<4x8xf32> -> vector<4x8xf32>
    %c688 = arith.constant 688 : index
    %c0_161 = arith.constant 0 : index
    %257 = vector.load %arg0[%c688, %c0_161] : memref<704x32xf32, #tpu.memory_space<vmem>>, vector<1x8xf32>
    %258 = vector.broadcast %257 : vector<1x8xf32> to vector<4x8xf32>
    %259 = arith.addf %256, %258 : vector<4x8xf32>
    %c0_162 = arith.constant 0 : index
    %c16 = arith.constant 16 : index
    %260 = vector.load %arg3[%c0_162, %c16] : memref<8x128xf32, #tpu.memory_space<vmem>>, vector<4x8xf32>
    tpu.vector_store %arg3[%c0_162, %c16], %259 {strides = array<i32>} : memref<8x128xf32, #tpu.memory_space<vmem>>, vector<4x8xf32>,
    return
  }
}

</mosaic_0001>

<llo_original>
// kernel: forward.1
$region0: #{forward.1}
  #allocation0 [shape = 'u32[]', space=smem, size = 0x4, offset = 0x4, fixed_abs, tag = 'smem constant byte address 0x4 - core index']
  #allocation1 [shape = 'u32[72,128]{1,0:T(1,128)}', space=vmem, size = 0x9000, scoped, tag = 'internal scratch']
  #allocation2 [shape = 'f32[3,16,16]{2,1,0:T(8,128)}', space=vmem, size = 0x6000, scoped, tag = 'scratch operand']
  %s0 = inlined_call_operand.vmem [shape: f32[704,32], index: 0, kind: input, shape index: {}]
  %s1 = inlined_call_operand.vmem [shape: f32[6,6,24], index: 1, kind: input, shape index: {}]
  %s2 = inlined_call_operand.vmem [shape: f32[5,4,16], index: 2, kind: input, shape index: {}]
  %s3 = inlined_call_operand.vmem [shape: f32[8,128], index: 3, kind: output, shape index: {}]
  %s4 = sld [smem:[#allocation0]]
  $region22: #{forward.1} parent=0
    _
  %s6 = ssub.s32 1, %s4
  %s7 = scalar_select 0, %s6, %s4
  // Predicated region
  $region2: #{forward.1} parent=0 // pred_check
    _
  $region3: #{forward.1} parent=0 // pred_check_branch
    %9 = sbr.rel (0) target = $region5
  $region4: #{forward.1} parent=0 // pred_region
    _
  $region5: #{forward.1} parent=0 // pred_fallthru
    _
  // Predicated region
  $region6: #{forward.1} parent=0 // pred_check
    _
  $region7: #{forward.1} parent=0 // pred_check_branch
    %11 = sbr.rel (0) target = $region9
  $region8: #{forward.1} parent=0 // pred_region
    _
  $region9: #{forward.1} parent=0 // pred_fallthru
    _
  // Predicated region
  $region10: #{forward.1} parent=0 // pred_check
    _
  $region11: #{forward.1} parent=0 // pred_check_branch
    %13 = sbr.rel (0) target = $region13
  $region12: #{forward.1} parent=0 // pred_region
    _
  $region13: #{forward.1} parent=0 // pred_fallthru
    _
  %vm14 = vcmask 130048
  %15 = vst.msk [vmem:[#allocation2] sm:$0xff] %vm14, 0.0
  %16 = vst.msk [vmem:[#allocation2 + $0x8] sm:$0xff] %vm14, 0.0
  %17 = vst.msk [vmem:[#allocation2 + $0x10] sm:$0xff] %vm14, 0.0
  %18 = vst.msk [vmem:[#allocation2 + $0x18] sm:$0xff] %vm14, 0.0
  %19 = vst.msk [vmem:[#allocation2 + $0x20] sm:$0xff] %vm14, 0.0
  %20 = vst.msk [vmem:[#allocation2 + $0x28] sm:$0xff] %vm14, 0.0
  %21 = vst [vmem:[%s3] sm:$0xff] 0.0
  %v22 = vld [vmem:[%s1] sm:$0x3f]
  %s23 = scalar_lea.vmem %s1, 24
  %v24 = vld [vmem:[%s23] sm:$0x3f]
  %v25 = vmul.f32 %v22, %v24
  %v26 = vld [vmem:[%s0] sm:$0xff]
  %v27 = vld [vmem:[%s0 + $0x8] sm:$0xff]
  %v28 = vld [vmem:[%s0 + $0x10] sm:$0xff]
  %v29 = vld [vmem:[%s0 + $0x18] sm:$0x1]
  %v30 = vperm.slane %v29, 0
  %vm31 = vcmask 195584
  %v33 = vsel %vm31, %v25, 0
  %35 = vmatpush.msra.mxu0 0.0
  %36 = vmatpush.msra.mxu0 0.0
  %37 = vmatpush.msra.mxu0 0.0
  %38 = vmatpush.msra.mxu0 0.0
  %39 = vmatpush.msra.mxu0 0.0
  %40 = vmatpush.msra.mxu0 0.0
  %41 = vmatpush.msra.mxu0 0.0
  %42 = vmatpush.msra.mxu0 0.0
  %43 = vmatpush.msra.mxu0 0.0
  %44 = vmatpush.msra.mxu0 0.0
  %45 = vmatpush.msra.mxu0 0.0
  %46 = vmatpush.msra.mxu0 0.0
  %47 = vmatpush.msra.mxu0 0.0
  %48 = vmatpush.msra.mxu0 %v28
  %49 = vmatpush.msra.mxu0 %v27
  %50 = vmatpush.msra.mxu0 %v26
  %51 = vmatmul.f32.gmra.mxu0 %v33
  %v52 = vpop.f32.mrf.mxu0
  %v53 = vadd.f32 %v30, %v52
  %54 = vdwg.mxu0
  %vm55 = vcmask 128000
  %56 = vst.msk [vmem:[#allocation2] sm:$0x3f] %vm55, %v53
  %s57 = scalar_lea.vmem %s1, 32
  %v58 = vld [vmem:[%s57] sm:$0x3f]
  %v59 = vmul.f32 %v22, %v58
  %v60 = vld [vmem:[%s0 + $0x20] sm:$0xff]
  %v61 = vld [vmem:[%s0 + $0x28] sm:$0xff]
  %v62 = vld [vmem:[%s0 + $0x30] sm:$0xff]
  %v63 = vld [vmem:[%s0 + $0x38] sm:$0x1]
  %v64 = vperm.slane %v63, 0
  %v66 = vsel %vm31, %v59, 0
  %68 = vmatpush.msra.mxu0 0.0
  %69 = vmatpush.msra.mxu0 0.0
  %70 = vmatpush.msra.mxu0 0.0
  %71 = vmatpush.msra.mxu0 0.0
  %72 = vmatpush.msra.mxu0 0.0
  %73 = vmatpush.msra.mxu0 0.0
  %74 = vmatpush.msra.mxu0 0.0
  %75 = vmatpush.msra.mxu0 0.0
  %76 = vmatpush.msra.mxu0 0.0
  %77 = vmatpush.msra.mxu0 0.0
  %78 = vmatpush.msra.mxu0 0.0
  %79 = vmatpush.msra.mxu0 0.0
  %80 = vmatpush.msra.mxu0 0.0
  %81 = vmatpush.msra.mxu0 %v62
  %82 = vmatpush.msra.mxu0 %v61
  %83 = vmatpush.msra.mxu0 %v60
  %84 = vmatmul.f32.gmra.mxu0 %v66
  %v85 = vpop.f32.mrf.mxu0
  %v86 = vadd.f32 %v64, %v85
  %87 = vdwg.mxu0
  %s88 = scalar_lea.vmem [#allocation2], 16
  %89 = vst.msk [vmem:[%s88] sm:$0x3f] %vm55, %v86
  %s90 = scalar_lea.vmem %s1, 40
  %v91 = vld [vmem:[%s90] sm:$0x3f]
  %v92 = vmul.f32 %v22, %v91
  %v93 = vld [vmem:[%s0 + $0x40] sm:$0xff]
  %v94 = vld [vmem:[%s0 + $0x48] sm:$0xff]
  %v95 = vld [vmem:[%s0 + $0x50] sm:$0xff]
  %v96 = vld [vmem:[%s0 + $0x58] sm:$0x1]
  %v97 = vperm.slane %v96, 0
  %v99 = vsel %vm31, %v92, 0
  %101 = vmatpush.msra.mxu0 0.0
  %102 = vmatpush.msra.mxu0 0.0
  %103 = vmatpush.msra.mxu0 0.0
  %104 = vmatpush.msra.mxu0 0.0
  %105 = vmatpush.msra.mxu0 0.0
  %106 = vmatpush.msra.mxu0 0.0
  %107 = vmatpush.msra.mxu0 0.0
  %108 = vmatpush.msra.mxu0 0.0
  %109 = vmatpush.msra.mxu0 0.0
  %110 = vmatpush.msra.mxu0 0.0
  %111 = vmatpush.msra.mxu0 0.0
  %112 = vmatpush.msra.mxu0 0.0
  %113 = vmatpush.msra.mxu0 0.0
  %114 = vmatpush.msra.mxu0 %v95
  %115 = vmatpush.msra.mxu0 %v94
  %116 = vmatpush.msra.mxu0 %v93
  %117 = vmatmul.f32.gmra.mxu0 %v99
  %v118 = vpop.f32.mrf.mxu0
  %v119 = vadd.f32 %v97, %v118
  %120 = vdwg.mxu0
  %s121 = scalar_lea.vmem [#allocation2], 32
  %122 = vst.msk [vmem:[%s121] sm:$0x3f] %vm55, %v119
  %v123 = vld [vmem:[%s2] sm:$0xf]
  %s124 = scalar_lea.vmem %s2, 8
  %v125 = vld [vmem:[%s124] sm:$0xf]
  %v126 = vmul.f32 %v123, %v125
  %v127 = vld [vmem:[%s0 + $0x1c8] sm:$0xff]
  %v128 = vld [vmem:[%s0 + $0x1d0] sm:$0xff]
  %v129 = vld [vmem:[%s0 + $0x1d8] sm:$0x1]
  %v130 = vperm.slane %v129, 0
  %v132 = vsel %vm14, %v126, 0
  %134 = vmatpush.msra.mxu0 0.0
  %135 = vmatpush.msra.mxu0 0.0
  %136 = vmatpush.msra.mxu0 0.0
  %137 = vmatpush.msra.mxu0 0.0
  %138 = vmatpush.msra.mxu0 0.0
  %139 = vmatpush.msra.mxu0 0.0
  %140 = vmatpush.msra.mxu0 0.0
  %141 = vmatpush.msra.mxu0 0.0
  %142 = vmatpush.msra.mxu0 0.0
  %143 = vmatpush.msra.mxu0 0.0
  %144 = vmatpush.msra.mxu0 0.0
  %145 = vmatpush.msra.mxu0 0.0
  %146 = vmatpush.msra.mxu0 0.0
  %147 = vmatpush.msra.mxu0 0.0
  %148 = vmatpush.msra.mxu0 %v128
  %149 = vmatpush.msra.mxu0 %v127
  %150 = vmatmul.f32.gmra.mxu0 %v132
  %v151 = vpop.f32.mrf.mxu0
  %v152 = vadd.f32 %v130, %v151
  %153 = vdwg.mxu0
  %vm154 = vcmask 125952
  %155 = vst.msk [vmem:[#allocation2 + $0x8] sm:$0xf] %vm154, %v152
  %s156 = scalar_lea.vmem %s2, 12
  %v157 = vld [vmem:[%s156] sm:$0xf]
  %v158 = vmul.f32 %v123, %v157
  %v159 = vld [vmem:[%s0 + $0x1e0] sm:$0xff]
  %v160 = vld [vmem:[%s0 + $0x1e8] sm:$0xff]
  %v161 = vld [vmem:[%s0 + $0x1f0] sm:$0x1]
  %v162 = vperm.slane %v161, 0
  %v164 = vsel %vm14, %v158, 0
  %166 = vmatpush.msra.mxu0 0.0
  %167 = vmatpush.msra.mxu0 0.0
  %168 = vmatpush.msra.mxu0 0.0
  %169 = vmatpush.msra.mxu0 0.0
  %170 = vmatpush.msra.mxu0 0.0
  %171 = vmatpush.msra.mxu0 0.0
  %172 = vmatpush.msra.mxu0 0.0
  %173 = vmatpush.msra.mxu0 0.0
  %174 = vmatpush.msra.mxu0 0.0
  %175 = vmatpush.msra.mxu0 0.0
  %176 = vmatpush.msra.mxu0 0.0
  %177 = vmatpush.msra.mxu0 0.0
  %178 = vmatpush.msra.mxu0 0.0
  %179 = vmatpush.msra.mxu0 0.0
  %180 = vmatpush.msra.mxu0 %v160
  %181 = vmatpush.msra.mxu0 %v159
  %182 = vmatmul.f32.gmra.mxu0 %v164
  %v183 = vpop.f32.mrf.mxu0
  %v184 = vadd.f32 %v162, %v183
  %185 = vdwg.mxu0
  %186 = vst.msk [vmem:[%s88 + $0x8] sm:$0xf] %vm154, %v184
  %s187 = scalar_lea.vmem %s2, 16
  %v188 = vld [vmem:[%s187] sm:$0xf]
  %v189 = vmul.f32 %v123, %v188
  %v190 = vld [vmem:[%s0 + $0x1f8] sm:$0xff]
  %v191 = vld [vmem:[%s0 + $0x200] sm:$0xff]
  %v192 = vld [vmem:[%s0 + $0x208] sm:$0x1]
  %v193 = vperm.slane %v192, 0
  %v195 = vsel %vm14, %v189, 0
  %197 = vmatpush.msra.mxu0 0.0
  %198 = vmatpush.msra.mxu0 0.0
  %199 = vmatpush.msra.mxu0 0.0
  %200 = vmatpush.msra.mxu0 0.0
  %201 = vmatpush.msra.mxu0 0.0
  %202 = vmatpush.msra.mxu0 0.0
  %203 = vmatpush.msra.mxu0 0.0
  %204 = vmatpush.msra.mxu0 0.0
  %205 = vmatpush.msra.mxu0 0.0
  %206 = vmatpush.msra.mxu0 0.0
  %207 = vmatpush.msra.mxu0 0.0
  %208 = vmatpush.msra.mxu0 0.0
  %209 = vmatpush.msra.mxu0 0.0
  %210 = vmatpush.msra.mxu0 0.0
  %211 = vmatpush.msra.mxu0 %v191
  %212 = vmatpush.msra.mxu0 %v190
  %213 = vmatmul.f32.gmra.mxu0 %v195
  %v214 = vpop.f32.mrf.mxu0
  %v215 = vadd.f32 %v193, %v214
  %216 = vdwg.mxu0
  %217 = vst.msk [vmem:[%s121 + $0x8] sm:$0xf] %vm154, %v215
  %v218 = vld [vmem:[%s1] sm:$0x3f]
  %s219 = scalar_lea.vmem %s1, 8
  %v220 = vld [vmem:[%s219] sm:$0x3f]
  %v221 = vmul.f32 %v218, %v220
  %v222 = vld [vmem:[%s0 + $0x60] sm:$0xff]
  %v223 = vld [vmem:[%s0 + $0x68] sm:$0xff]
  %v224 = vld [vmem:[%s0 + $0x70] sm:$0xff]
  %v225 = vld [vmem:[%s0 + $0x78] sm:$0x1]
  %v226 = vperm.slane %v225, 0
  %v228 = vsel %vm31, %v221, 0
  %230 = vmatpush.msra.mxu0 0.0
  %231 = vmatpush.msra.mxu0 0.0
  %232 = vmatpush.msra.mxu0 0.0
  %233 = vmatpush.msra.mxu0 0.0
  %234 = vmatpush.msra.mxu0 0.0
  %235 = vmatpush.msra.mxu0 0.0
  %236 = vmatpush.msra.mxu0 0.0
  %237 = vmatpush.msra.mxu0 0.0
  %238 = vmatpush.msra.mxu0 0.0
  %239 = vmatpush.msra.mxu0 0.0
  %240 = vmatpush.msra.mxu0 0.0
  %241 = vmatpush.msra.mxu0 0.0
  %242 = vmatpush.msra.mxu0 0.0
  %243 = vmatpush.msra.mxu0 %v224
  %244 = vmatpush.msra.mxu0 %v223
  %245 = vmatpush.msra.mxu0 %v222
  %246 = vmatmul.f32.gmra.mxu0 %v228
  %v247 = vpop.f32.mrf.mxu0
  %v248 = vadd.f32 %v226, %v247
  %249 = vdwg.mxu0
  %v250 = vld [vmem:[#allocation2] sm:$0xff]
  %v251 = vld [vmem:[#allocation2 + $0x8] sm:$0xff]
  %v252 = vld [vmem:[%s0 + $0x80] sm:$0xff]
  %v253 = vld [vmem:[%s0 + $0x88] sm:$0xff]
  %v254 = vld [vmem:[%s0 + $0x90] sm:$0x1]
  %v255 = vperm.slane %v254, 0
  %v257 = vsel %vm14, %v250, 0
  %v260 = vsel %vm14, %v251, 0
  %262 = vmatpush.msra.mxu0 0.0
  %263 = vmatpush.msra.mxu0 0.0
  %264 = vmatpush.msra.mxu0 0.0
  %265 = vmatpush.msra.mxu0 0.0
  %266 = vmatpush.msra.mxu0 0.0
  %267 = vmatpush.msra.mxu0 0.0
  %268 = vmatpush.msra.mxu0 0.0
  %269 = vmatpush.msra.mxu0 0.0
  %270 = vmatpush.msra.mxu0 0.0
  %271 = vmatpush.msra.mxu0 0.0
  %272 = vmatpush.msra.mxu0 0.0
  %273 = vmatpush.msra.mxu0 0.0
  %274 = vmatpush.msra.mxu0 0.0
  %275 = vmatpush.msra.mxu0 0.0
  %276 = vmatpush.msra.mxu0 %v253
  %277 = vmatpush.msra.mxu0 %v252
  %278 = vmatmul.f32.gmra.mxu0 %v257
  %v279 = vpop.f32.mrf.mxu0
  %v280 = vadd.f32 %v255, %v279
  %281 = vmatmul.f32.gmra.mxu0 %v260
  %v282 = vpop.f32.mrf.mxu0
  %v283 = vadd.f32 %v255, %v282
  %284 = vdwg.mxu0
  %286 = vrot.lane.b32.xlu0 %v248, 112
  %v287 = vpop.permute.xlu0 %286
  %v288 = vsel %vm14, %v287, 0
  %v291 = vsel %vm14, %v280, 0
  %v294 = vsel %vm14, %v283, 0
  %296 = vmatpush.xpose.msra.mxu0 0.0
  %297 = vmatpush.xpose.msra.mxu0 0.0
  %298 = vmatpush.xpose.msra.mxu0 0.0
  %299 = vmatpush.xpose.msra.mxu0 0.0
  %300 = vmatpush.xpose.msra.mxu0 0.0
  %301 = vmatpush.xpose.msra.mxu0 0.0
  %302 = vmatpush.xpose.msra.mxu0 0.0
  %303 = vmatpush.xpose.msra.mxu0 0.0
  %304 = vmatpush.xpose.msra.mxu0 0.0
  %305 = vmatpush.xpose.msra.mxu0 0.0
  %306 = vmatpush.xpose.msra.mxu0 0.0
  %307 = vmatpush.xpose.msra.mxu0 0.0
  %308 = vmatpush.xpose.msra.mxu0 0.0
  %309 = vmatpush.xpose.msra.mxu0 0.0
  %310 = vmatpush.xpose.msra.mxu0 %v294
  %311 = vmatpush.xpose.msra.mxu0 %v291
  %312 = vmatmul.f32.gmra.mxu0 %v288
  %v313 = vpop.f32.mrf.mxu0
  %v314 = vadd.f32 0.0, %v313
  %315 = vdwg.mxu0
  %v316 = vmul.f32 %v314, 0.25
  %v317 = vld [vmem:[%s0 + $0x1c0] sm:$0x3f]
  %v318 = vadd.f32 %v316, %v317
  %v319 = vsel %vm55, %v318, -inf
  %320 = vmax.xlane.f32.xlu0 %v319
  %v321 = vpop.xlane.xlu0 %320
  %v322 = vsub.f32 %v318, %v321
  %v323 = vmul.f32 %v322, 1.442695
  %v324 = vpow.pop %v323
  %v325 = vsel %vm55, %v324, 0.0
  %326 = vadd.xlane.f32.xlu0 %v325
  %v327 = vpop.xlane.xlu0 %326
  %v328 = vrcp.pop %v327
  %v329 = vmul.f32 %v327, %v328
  %v330 = vsub.f32 1.0, %v329
  %v331 = vmul.f32 %v328, %v330
  %v332 = vadd.f32 %v328, %v331
  %vm333 = vweird.f32 %v327
  %vm334 = vweird.f32 %v328
  %vm335 = vmor %vm333, %vm334
  %v336 = vsel %vm335, %v328, %v332
  %v337 = vand.u32 2147483647, %v327
  %vm338 = vcmp.eq.f32.partialorder %v337, 8.507059e+37
  %v339 = vand.u32 %v327, 2147483648
  %v340 = vor.u32 1.1754944e-38, %v339
  %v341 = vsel %vm338, %v340, %v336
  %v342 = vmul.f32 %v324, %v341
  %343 = vrot.lane.b32.xlu0 %v280, 112
  %v344 = vpop.permute.xlu0 %343
  %345 = vrot.lane.b32.xlu0 %v283, 112
  %v346 = vpop.permute.xlu0 %345
  %v350 = vsel %vm14, %v342, 0
  %352 = vmatpush.msra.mxu0 0.0
  %353 = vmatpush.msra.mxu0 0.0
  %354 = vmatpush.msra.mxu0 0.0
  %355 = vmatpush.msra.mxu0 0.0
  %356 = vmatpush.msra.mxu0 0.0
  %357 = vmatpush.msra.mxu0 0.0
  %358 = vmatpush.msra.mxu0 0.0
  %359 = vmatpush.msra.mxu0 0.0
  %360 = vmatpush.msra.mxu0 0.0
  %361 = vmatpush.msra.mxu0 0.0
  %362 = vmatpush.msra.mxu0 0.0
  %363 = vmatpush.msra.mxu0 0.0
  %364 = vmatpush.msra.mxu0 0.0
  %365 = vmatpush.msra.mxu0 0.0
  %366 = vmatpush.msra.mxu0 %v346
  %367 = vmatpush.msra.mxu0 %v344
  %368 = vmatmul.f32.gmra.mxu0 %v350
  %v369 = vpop.f32.mrf.mxu0
  %v370 = vadd.f32 0.0, %v369
  %371 = vdwg.mxu0
  %373 = vrot.lane.b32.xlu0 %v370, 16
  %v374 = vpop.permute.xlu0 %373
  %v376 = vsel %vm14, %v248, %v374
  %v377 = vld [vmem:[%s0 + $0x98] sm:$0xff]
  %v378 = vld [vmem:[%s0 + $0xa0] sm:$0xff]
  %v379 = vld [vmem:[%s0 + $0xa8] sm:$0xff]
  %v380 = vld [vmem:[%s0 + $0xb0] sm:$0xff]
  %v381 = vld [vmem:[%s0 + $0xb8] sm:$0x1]
  %v382 = vperm.slane %v381, 0
  %vm383 = vcmask 261120
  %v385 = vsel %vm383, %v376, 0
  %387 = vmatpush.msra.mxu0 0.0
  %388 = vmatpush.msra.mxu0 0.0
  %389 = vmatpush.msra.mxu0 0.0
  %390 = vmatpush.msra.mxu0 0.0
  %391 = vmatpush.msra.mxu0 0.0
  %392 = vmatpush.msra.mxu0 0.0
  %393 = vmatpush.msra.mxu0 0.0
  %394 = vmatpush.msra.mxu0 0.0
  %395 = vmatpush.msra.mxu0 0.0
  %396 = vmatpush.msra.mxu0 0.0
  %397 = vmatpush.msra.mxu0 0.0
  %398 = vmatpush.msra.mxu0 0.0
  %399 = vmatpush.msra.mxu0 %v380
  %400 = vmatpush.msra.mxu0 %v379
  %401 = vmatpush.msra.mxu0 %v378
  %402 = vmatpush.msra.mxu0 %v377
  %403 = vmatmul.f32.gmra.mxu0 %v385
  %v404 = vpop.f32.mrf.mxu0
  %v405 = vadd.f32 %v382, %v404
  %406 = vdwg.mxu0
  %vm407 = vcmp.ge.f32.partialorder %v405, 0.0
  %v408 = vmul.f32 %v405, 0.01
  %v409 = vsel %vm407, %v405, %v408
  %v410 = vld [vmem:[%s0 + $0xc0] sm:$0xff]
  %v411 = vld [vmem:[%s0 + $0xc8] sm:$0xff]
  %v412 = vld [vmem:[%s0 + $0xd0] sm:$0xff]
  %v413 = vld [vmem:[%s0 + $0xd8] sm:$0xff]
  %v414 = vld [vmem:[%s0 + $0xe0] sm:$0x1]
  %v415 = vperm.slane %v414, 0
  %v417 = vsel %vm383, %v409, 0
  %419 = vmatpush.msra.mxu0 0.0
  %420 = vmatpush.msra.mxu0 0.0
  %421 = vmatpush.msra.mxu0 0.0
  %422 = vmatpush.msra.mxu0 0.0
  %423 = vmatpush.msra.mxu0 0.0
  %424 = vmatpush.msra.mxu0 0.0
  %425 = vmatpush.msra.mxu0 0.0
  %426 = vmatpush.msra.mxu0 0.0
  %427 = vmatpush.msra.mxu0 0.0
  %428 = vmatpush.msra.mxu0 0.0
  %429 = vmatpush.msra.mxu0 0.0
  %430 = vmatpush.msra.mxu0 0.0
  %431 = vmatpush.msra.mxu0 %v413
  %432 = vmatpush.msra.mxu0 %v412
  %433 = vmatpush.msra.mxu0 %v411
  %434 = vmatpush.msra.mxu0 %v410
  %435 = vmatmul.f32.gmra.mxu0 %v417
  %v436 = vpop.f32.mrf.mxu0
  %v437 = vadd.f32 %v415, %v436
  %438 = vdwg.mxu0
  %vm439 = vcmp.ge.f32.partialorder %v437, 0.0
  %v440 = vmul.f32 %v437, 0.01
  %v441 = vsel %vm439, %v437, %v440
  %v442 = vld [vmem:[%s0 + $0xe8] sm:$0xff]
  %v443 = vld [vmem:[%s0 + $0xf0] sm:$0xff]
  %v444 = vld [vmem:[%s0 + $0xf8] sm:$0xff]
  %v445 = vld [vmem:[%s0 + $0x100] sm:$0xff]
  %v446 = vld [vmem:[%s0 + $0x108] sm:$0x1]
  %v447 = vperm.slane %v446, 0
  %v449 = vsel %vm383, %v441, 0
  %451 = vmatpush.msra.mxu0 0.0
  %452 = vmatpush.msra.mxu0 0.0
  %453 = vmatpush.msra.mxu0 0.0
  %454 = vmatpush.msra.mxu0 0.0
  %455 = vmatpush.msra.mxu0 0.0
  %456 = vmatpush.msra.mxu0 0.0
  %457 = vmatpush.msra.mxu0 0.0
  %458 = vmatpush.msra.mxu0 0.0
  %459 = vmatpush.msra.mxu0 0.0
  %460 = vmatpush.msra.mxu0 0.0
  %461 = vmatpush.msra.mxu0 0.0
  %462 = vmatpush.msra.mxu0 0.0
  %463 = vmatpush.msra.mxu0 %v445
  %464 = vmatpush.msra.mxu0 %v444
  %465 = vmatpush.msra.mxu0 %v443
  %466 = vmatpush.msra.mxu0 %v442
  %467 = vmatmul.f32.gmra.mxu0 %v449
  %v468 = vpop.f32.mrf.mxu0
  %v469 = vadd.f32 %v447, %v468
  %470 = vdwg.mxu0
  %s471 = scalar_lea.vmem %s1, 16
  %v472 = vld [vmem:[%s471] sm:$0x3f]
  %v473 = vmul.f32 %v218, %v472
  %v474 = vld [vmem:[%s0 + $0x110] sm:$0xff]
  %v475 = vld [vmem:[%s0 + $0x118] sm:$0xff]
  %v476 = vld [vmem:[%s0 + $0x120] sm:$0xff]
  %v477 = vld [vmem:[%s0 + $0x128] sm:$0x1]
  %v478 = vperm.slane %v477, 0
  %v480 = vsel %vm31, %v473, 0
  %482 = vmatpush.msra.mxu0 0.0
  %483 = vmatpush.msra.mxu0 0.0
  %484 = vmatpush.msra.mxu0 0.0
  %485 = vmatpush.msra.mxu0 0.0
  %486 = vmatpush.msra.mxu0 0.0
  %487 = vmatpush.msra.mxu0 0.0
  %488 = vmatpush.msra.mxu0 0.0
  %489 = vmatpush.msra.mxu0 0.0
  %490 = vmatpush.msra.mxu0 0.0
  %491 = vmatpush.msra.mxu0 0.0
  %492 = vmatpush.msra.mxu0 0.0
  %493 = vmatpush.msra.mxu0 0.0
  %494 = vmatpush.msra.mxu0 0.0
  %495 = vmatpush.msra.mxu0 %v476
  %496 = vmatpush.msra.mxu0 %v475
  %497 = vmatpush.msra.mxu0 %v474
  %498 = vmatmul.f32.gmra.mxu0 %v480
  %v499 = vpop.f32.mrf.mxu0
  %v500 = vadd.f32 %v478, %v499
  %501 = vdwg.mxu0
  %v502 = vld [vmem:[%s88] sm:$0xff]
  %v503 = vld [vmem:[%s88 + $0x8] sm:$0xff]
  %v504 = vld [vmem:[%s0 + $0x130] sm:$0xff]
  %v505 = vld [vmem:[%s0 + $0x138] sm:$0xff]
  %v506 = vld [vmem:[%s0 + $0x140] sm:$0x1]
  %v507 = vperm.slane %v506, 0
  %v509 = vsel %vm14, %v502, 0
  %v512 = vsel %vm14, %v503, 0
  %514 = vmatpush.msra.mxu0 0.0
  %515 = vmatpush.msra.mxu0 0.0
  %516 = vmatpush.msra.mxu0 0.0
  %517 = vmatpush.msra.mxu0 0.0
  %518 = vmatpush.msra.mxu0 0.0
  %519 = vmatpush.msra.mxu0 0.0
  %520 = vmatpush.msra.mxu0 0.0
  %521 = vmatpush.msra.mxu0 0.0
  %522 = vmatpush.msra.mxu0 0.0
  %523 = vmatpush.msra.mxu0 0.0
  %524 = vmatpush.msra.mxu0 0.0
  %525 = vmatpush.msra.mxu0 0.0
  %526 = vmatpush.msra.mxu0 0.0
  %527 = vmatpush.msra.mxu0 0.0
  %528 = vmatpush.msra.mxu0 %v505
  %529 = vmatpush.msra.mxu0 %v504
  %530 = vmatmul.f32.gmra.mxu0 %v509
  %v531 = vpop.f32.mrf.mxu0
  %v532 = vadd.f32 %v507, %v531
  %533 = vmatmul.f32.gmra.mxu0 %v512
  %v534 = vpop.f32.mrf.mxu0
  %v535 = vadd.f32 %v507, %v534
  %536 = vdwg.mxu0
  %538 = vrot.lane.b32.xlu0 %v500, 112
  %v539 = vpop.permute.xlu0 %538
  %v540 = vsel %vm14, %v539, 0
  %v543 = vsel %vm14, %v532, 0
  %v546 = vsel %vm14, %v535, 0
  %548 = vmatpush.xpose.msra.mxu0 0.0
  %549 = vmatpush.xpose.msra.mxu0 0.0
  %550 = vmatpush.xpose.msra.mxu0 0.0
  %551 = vmatpush.xpose.msra.mxu0 0.0
  %552 = vmatpush.xpose.msra.mxu0 0.0
  %553 = vmatpush.xpose.msra.mxu0 0.0
  %554 = vmatpush.xpose.msra.mxu0 0.0
  %555 = vmatpush.xpose.msra.mxu0 0.0
  %556 = vmatpush.xpose.msra.mxu0 0.0
  %557 = vmatpush.xpose.msra.mxu0 0.0
  %558 = vmatpush.xpose.msra.mxu0 0.0
  %559 = vmatpush.xpose.msra.mxu0 0.0
  %560 = vmatpush.xpose.msra.mxu0 0.0
  %561 = vmatpush.xpose.msra.mxu0 0.0
  %562 = vmatpush.xpose.msra.mxu0 %v546
  %563 = vmatpush.xpose.msra.mxu0 %v543
  %564 = vmatmul.f32.gmra.mxu0 %v540
  %v565 = vpop.f32.mrf.mxu0
  %v566 = vadd.f32 0.0, %v565
  %567 = vdwg.mxu0
  %v568 = vmul.f32 %v566, 0.25
  %v569 = vadd.f32 %v568, %v317
  %v570 = vsel %vm55, %v569, -inf
  %571 = vmax.xlane.f32.xlu0 %v570
  %v572 = vpop.xlane.xlu0 %571
  %v573 = vsub.f32 %v569, %v572
  %v574 = vmul.f32 %v573, 1.442695
  %v575 = vpow.pop %v574
  %v576 = vsel %vm55, %v575, 0.0
  %577 = vadd.xlane.f32.xlu0 %v576
  %v578 = vpop.xlane.xlu0 %577
  %v579 = vrcp.pop %v578
  %v580 = vmul.f32 %v578, %v579
  %v581 = vsub.f32 1.0, %v580
  %v582 = vmul.f32 %v579, %v581
  %v583 = vadd.f32 %v579, %v582
  %vm584 = vweird.f32 %v578
  %vm585 = vweird.f32 %v579
  %vm586 = vmor %vm584, %vm585
  %v587 = vsel %vm586, %v579, %v583
  %v588 = vand.u32 2147483647, %v578
  %vm589 = vcmp.eq.f32.partialorder %v588, 8.507059e+37
  %v590 = vand.u32 %v578, 2147483648
  %v591 = vor.u32 1.1754944e-38, %v590
  %v592 = vsel %vm589, %v591, %v587
  %v593 = vmul.f32 %v575, %v592
  %594 = vrot.lane.b32.xlu0 %v532, 112
  %v595 = vpop.permute.xlu0 %594
  %596 = vrot.lane.b32.xlu0 %v535, 112
  %v597 = vpop.permute.xlu0 %596
  %v601 = vsel %vm14, %v593, 0
  %603 = vmatpush.msra.mxu0 0.0
  %604 = vmatpush.msra.mxu0 0.0
  %605 = vmatpush.msra.mxu0 0.0
  %606 = vmatpush.msra.mxu0 0.0
  %607 = vmatpush.msra.mxu0 0.0
  %608 = vmatpush.msra.mxu0 0.0
  %609 = vmatpush.msra.mxu0 0.0
  %610 = vmatpush.msra.mxu0 0.0
  %611 = vmatpush.msra.mxu0 0.0
  %612 = vmatpush.msra.mxu0 0.0
  %613 = vmatpush.msra.mxu0 0.0
  %614 = vmatpush.msra.mxu0 0.0
  %615 = vmatpush.msra.mxu0 0.0
  %616 = vmatpush.msra.mxu0 0.0
  %617 = vmatpush.msra.mxu0 %v597
  %618 = vmatpush.msra.mxu0 %v595
  %619 = vmatmul.f32.gmra.mxu0 %v601
  %v620 = vpop.f32.mrf.mxu0
  %v621 = vadd.f32 0.0, %v620
  %622 = vdwg.mxu0
  %624 = vrot.lane.b32.xlu0 %v621, 16
  %v625 = vpop.permute.xlu0 %624
  %v627 = vsel %vm14, %v500, %v625
  %v628 = vld [vmem:[%s0 + $0x148] sm:$0xff]
  %v629 = vld [vmem:[%s0 + $0x150] sm:$0xff]
  %v630 = vld [vmem:[%s0 + $0x158] sm:$0xff]
  %v631 = vld [vmem:[%s0 + $0x160] sm:$0xff]
  %v632 = vld [vmem:[%s0 + $0x168] sm:$0x1]
  %v633 = vperm.slane %v632, 0
  %v635 = vsel %vm383, %v627, 0
  %637 = vmatpush.msra.mxu0 0.0
  %638 = vmatpush.msra.mxu0 0.0
  %639 = vmatpush.msra.mxu0 0.0
  %640 = vmatpush.msra.mxu0 0.0
  %641 = vmatpush.msra.mxu0 0.0
  %642 = vmatpush.msra.mxu0 0.0
  %643 = vmatpush.msra.mxu0 0.0
  %644 = vmatpush.msra.mxu0 0.0
  %645 = vmatpush.msra.mxu0 0.0
  %646 = vmatpush.msra.mxu0 0.0
  %647 = vmatpush.msra.mxu0 0.0
  %648 = vmatpush.msra.mxu0 0.0
  %649 = vmatpush.msra.mxu0 %v631
  %650 = vmatpush.msra.mxu0 %v630
  %651 = vmatpush.msra.mxu0 %v629
  %652 = vmatpush.msra.mxu0 %v628
  %653 = vmatmul.f32.gmra.mxu0 %v635
  %v654 = vpop.f32.mrf.mxu0
  %v655 = vadd.f32 %v633, %v654
  %656 = vdwg.mxu0
  %vm657 = vcmp.ge.f32.partialorder %v655, 0.0
  %v658 = vmul.f32 %v655, 0.01
  %v659 = vsel %vm657, %v655, %v658
  %v660 = vld [vmem:[%s0 + $0x170] sm:$0xff]
  %v661 = vld [vmem:[%s0 + $0x178] sm:$0xff]
  %v662 = vld [vmem:[%s0 + $0x180] sm:$0xff]
  %v663 = vld [vmem:[%s0 + $0x188] sm:$0xff]
  %v664 = vld [vmem:[%s0 + $0x190] sm:$0x1]
  %v665 = vperm.slane %v664, 0
  %v667 = vsel %vm383, %v659, 0
  %669 = vmatpush.msra.mxu0 0.0
  %670 = vmatpush.msra.mxu0 0.0
  %671 = vmatpush.msra.mxu0 0.0
  %672 = vmatpush.msra.mxu0 0.0
  %673 = vmatpush.msra.mxu0 0.0
  %674 = vmatpush.msra.mxu0 0.0
  %675 = vmatpush.msra.mxu0 0.0
  %676 = vmatpush.msra.mxu0 0.0
  %677 = vmatpush.msra.mxu0 0.0
  %678 = vmatpush.msra.mxu0 0.0
  %679 = vmatpush.msra.mxu0 0.0
  %680 = vmatpush.msra.mxu0 0.0
  %681 = vmatpush.msra.mxu0 %v663
  %682 = vmatpush.msra.mxu0 %v662
  %683 = vmatpush.msra.mxu0 %v661
  %684 = vmatpush.msra.mxu0 %v660
  %685 = vmatmul.f32.gmra.mxu0 %v667
  %v686 = vpop.f32.mrf.mxu0
  %v687 = vadd.f32 %v665, %v686
  %688 = vdwg.mxu0
  %vm689 = vcmp.ge.f32.partialorder %v687, 0.0
  %v690 = vmul.f32 %v687, 0.01
  %v691 = vsel %vm689, %v687, %v690
  %v692 = vld [vmem:[%s0 + $0x198] sm:$0xff]
  %v693 = vld [vmem:[%s0 + $0x1a0] sm:$0xff]
  %v694 = vld [vmem:[%s0 + $0x1a8] sm:$0xff]
  %v695 = vld [vmem:[%s0 + $0x1b0] sm:$0xff]
  %v696 = vld [vmem:[%s0 + $0x1b8] sm:$0x1]
  %v697 = vperm.slane %v696, 0
  %v699 = vsel %vm383, %v691, 0
  %701 = vmatpush.msra.mxu0 0.0
  %702 = vmatpush.msra.mxu0 0.0
  %703 = vmatpush.msra.mxu0 0.0
  %704 = vmatpush.msra.mxu0 0.0
  %705 = vmatpush.msra.mxu0 0.0
  %706 = vmatpush.msra.mxu0 0.0
  %707 = vmatpush.msra.mxu0 0.0
  %708 = vmatpush.msra.mxu0 0.0
  %709 = vmatpush.msra.mxu0 0.0
  %710 = vmatpush.msra.mxu0 0.0
  %711 = vmatpush.msra.mxu0 0.0
  %712 = vmatpush.msra.mxu0 0.0
  %713 = vmatpush.msra.mxu0 %v695
  %714 = vmatpush.msra.mxu0 %v694
  %715 = vmatpush.msra.mxu0 %v693
  %716 = vmatpush.msra.mxu0 %v692
  %717 = vmatmul.f32.gmra.mxu0 %v699
  %v718 = vpop.f32.mrf.mxu0
  %v719 = vadd.f32 %v697, %v718
  %720 = vdwg.mxu0
  %722 = vrot.lane.b32.xlu0 %v719, 8
  %v723 = vpop.permute.xlu0 %722
  %vm725 = vcmask 64512
  %v726 = vsel %vm725, %v469, %v723
  %727 = vst.msk [vmem:[%s3] sm:$0x3f] %vm55, %v726
  %v728 = vld [vmem:[%s2] sm:$0xf]
  %s729 = scalar_lea.vmem %s2, 4
  %v730 = vld [vmem:[%s729] sm:$0xf]
  %v731 = vmul.f32 %v728, %v730
  %v732 = vld [vmem:[%s0 + $0x210] sm:$0xff]
  %v733 = vld [vmem:[%s0 + $0x218] sm:$0xff]
  %v734 = vld [vmem:[%s0 + $0x220] sm:$0x1]
  %v735 = vperm.slane %v734, 0
  %v737 = vsel %vm14, %v731, 0
  %739 = vmatpush.msra.mxu0 0.0
  %740 = vmatpush.msra.mxu0 0.0
  %741 = vmatpush.msra.mxu0 0.0
  %742 = vmatpush.msra.mxu0 0.0
  %743 = vmatpush.msra.mxu0 0.0
  %744 = vmatpush.msra.mxu0 0.0
  %745 = vmatpush.msra.mxu0 0.0
  %746 = vmatpush.msra.mxu0 0.0
  %747 = vmatpush.msra.mxu0 0.0
  %748 = vmatpush.msra.mxu0 0.0
  %749 = vmatpush.msra.mxu0 0.0
  %750 = vmatpush.msra.mxu0 0.0
  %751 = vmatpush.msra.mxu0 0.0
  %752 = vmatpush.msra.mxu0 0.0
  %753 = vmatpush.msra.mxu0 %v733
  %754 = vmatpush.msra.mxu0 %v732
  %755 = vmatmul.f32.gmra.mxu0 %v737
  %v756 = vpop.f32.mrf.mxu0
  %v757 = vadd.f32 %v735, %v756
  %758 = vdwg.mxu0
  %v759 = vld [vmem:[%s121] sm:$0xff]
  %v760 = vld [vmem:[%s121 + $0x8] sm:$0xff]
  %v761 = vld [vmem:[%s0 + $0x228] sm:$0xff]
  %v762 = vld [vmem:[%s0 + $0x230] sm:$0xff]
  %v763 = vld [vmem:[%s0 + $0x238] sm:$0x1]
  %v764 = vperm.slane %v763, 0
  %v766 = vsel %vm14, %v759, 0
  %v769 = vsel %vm14, %v760, 0
  %771 = vmatpush.msra.mxu0 0.0
  %772 = vmatpush.msra.mxu0 0.0
  %773 = vmatpush.msra.mxu0 0.0
  %774 = vmatpush.msra.mxu0 0.0
  %775 = vmatpush.msra.mxu0 0.0
  %776 = vmatpush.msra.mxu0 0.0
  %777 = vmatpush.msra.mxu0 0.0
  %778 = vmatpush.msra.mxu0 0.0
  %779 = vmatpush.msra.mxu0 0.0
  %780 = vmatpush.msra.mxu0 0.0
  %781 = vmatpush.msra.mxu0 0.0
  %782 = vmatpush.msra.mxu0 0.0
  %783 = vmatpush.msra.mxu0 0.0
  %784 = vmatpush.msra.mxu0 0.0
  %785 = vmatpush.msra.mxu0 %v762
  %786 = vmatpush.msra.mxu0 %v761
  %787 = vmatmul.f32.gmra.mxu0 %v766
  %v788 = vpop.f32.mrf.mxu0
  %v789 = vadd.f32 %v764, %v788
  %790 = vmatmul.f32.gmra.mxu0 %v769
  %v791 = vpop.f32.mrf.mxu0
  %v792 = vadd.f32 %v764, %v791
  %793 = vdwg.mxu0
  %795 = vrot.lane.b32.xlu0 %v757, 112
  %v796 = vpop.permute.xlu0 %795
  %v797 = vsel %vm14, %v796, 0
  %v800 = vsel %vm14, %v789, 0
  %v803 = vsel %vm14, %v792, 0
  %805 = vmatpush.xpose.msra.mxu0 0.0
  %806 = vmatpush.xpose.msra.mxu0 0.0
  %807 = vmatpush.xpose.msra.mxu0 0.0
  %808 = vmatpush.xpose.msra.mxu0 0.0
  %809 = vmatpush.xpose.msra.mxu0 0.0
  %810 = vmatpush.xpose.msra.mxu0 0.0
  %811 = vmatpush.xpose.msra.mxu0 0.0
  %812 = vmatpush.xpose.msra.mxu0 0.0
  %813 = vmatpush.xpose.msra.mxu0 0.0
  %814 = vmatpush.xpose.msra.mxu0 0.0
  %815 = vmatpush.xpose.msra.mxu0 0.0
  %816 = vmatpush.xpose.msra.mxu0 0.0
  %817 = vmatpush.xpose.msra.mxu0 0.0
  %818 = vmatpush.xpose.msra.mxu0 0.0
  %819 = vmatpush.xpose.msra.mxu0 %v803
  %820 = vmatpush.xpose.msra.mxu0 %v800
  %821 = vmatmul.f32.gmra.mxu0 %v797
  %v822 = vpop.f32.mrf.mxu0
  %v823 = vadd.f32 0.0, %v822
  %824 = vdwg.mxu0
  %v825 = vmul.f32 %v823, 0.25
  %v826 = vld [vmem:[%s0 + $0x2b8] sm:$0xf]
  %v827 = vadd.f32 %v825, %v826
  %v828 = vsel %vm154, %v827, -inf
  %829 = vmax.xlane.f32.xlu0 %v828
  %v830 = vpop.xlane.xlu0 %829
  %v831 = vsub.f32 %v827, %v830
  %v832 = vmul.f32 %v831, 1.442695
  %v833 = vpow.pop %v832
  %v834 = vsel %vm154, %v833, 0.0
  %835 = vadd.xlane.f32.xlu0 %v834
  %v836 = vpop.xlane.xlu0 %835
  %v837 = vrcp.pop %v836
  %v838 = vmul.f32 %v836, %v837
  %v839 = vsub.f32 1.0, %v838
  %v840 = vmul.f32 %v837, %v839
  %v841 = vadd.f32 %v837, %v840
  %vm842 = vweird.f32 %v836
  %vm843 = vweird.f32 %v837
  %vm844 = vmor %vm842, %vm843
  %v845 = vsel %vm844, %v837, %v841
  %v846 = vand.u32 2147483647, %v836
  %vm847 = vcmp.eq.f32.partialorder %v846, 8.507059e+37
  %v848 = vand.u32 %v836, 2147483648
  %v849 = vor.u32 1.1754944e-38, %v848
  %v850 = vsel %vm847, %v849, %v845
  %v851 = vmul.f32 %v833, %v850
  %852 = vrot.lane.b32.xlu0 %v789, 112
  %v853 = vpop.permute.xlu0 %852
  %854 = vrot.lane.b32.xlu0 %v792, 112
  %v855 = vpop.permute.xlu0 %854
  %v859 = vsel %vm14, %v851, 0
  %861 = vmatpush.msra.mxu0 0.0
  %862 = vmatpush.msra.mxu0 0.0
  %863 = vmatpush.msra.mxu0 0.0
  %864 = vmatpush.msra.mxu0 0.0
  %865 = vmatpush.msra.mxu0 0.0
  %866 = vmatpush.msra.mxu0 0.0
  %867 = vmatpush.msra.mxu0 0.0
  %868 = vmatpush.msra.mxu0 0.0
  %869 = vmatpush.msra.mxu0 0.0
  %870 = vmatpush.msra.mxu0 0.0
  %871 = vmatpush.msra.mxu0 0.0
  %872 = vmatpush.msra.mxu0 0.0
  %873 = vmatpush.msra.mxu0 0.0
  %874 = vmatpush.msra.mxu0 0.0
  %875 = vmatpush.msra.mxu0 %v855
  %876 = vmatpush.msra.mxu0 %v853
  %877 = vmatmul.f32.gmra.mxu0 %v859
  %v878 = vpop.f32.mrf.mxu0
  %v879 = vadd.f32 0.0, %v878
  %880 = vdwg.mxu0
  %882 = vrot.lane.b32.xlu0 %v879, 16
  %v883 = vpop.permute.xlu0 %882
  %v885 = vsel %vm14, %v757, %v883
  %v886 = vld [vmem:[%s0 + $0x240] sm:$0xff]
  %v887 = vld [vmem:[%s0 + $0x248] sm:$0xff]
  %v888 = vld [vmem:[%s0 + $0x250] sm:$0xff]
  %v889 = vld [vmem:[%s0 + $0x258] sm:$0xff]
  %v890 = vld [vmem:[%s0 + $0x260] sm:$0x1]
  %v891 = vperm.slane %v890, 0
  %v893 = vsel %vm383, %v885, 0
  %895 = vmatpush.msra.mxu0 0.0
  %896 = vmatpush.msra.mxu0 0.0
  %897 = vmatpush.msra.mxu0 0.0
  %898 = vmatpush.msra.mxu0 0.0
  %899 = vmatpush.msra.mxu0 0.0
  %900 = vmatpush.msra.mxu0 0.0
  %901 = vmatpush.msra.mxu0 0.0
  %902 = vmatpush.msra.mxu0 0.0
  %903 = vmatpush.msra.mxu0 0.0
  %904 = vmatpush.msra.mxu0 0.0
  %905 = vmatpush.msra.mxu0 0.0
  %906 = vmatpush.msra.mxu0 0.0
  %907 = vmatpush.msra.mxu0 %v889
  %908 = vmatpush.msra.mxu0 %v888
  %909 = vmatpush.msra.mxu0 %v887
  %910 = vmatpush.msra.mxu0 %v886
  %911 = vmatmul.f32.gmra.mxu0 %v893
  %v912 = vpop.f32.mrf.mxu0
  %v913 = vadd.f32 %v891, %v912
  %914 = vdwg.mxu0
  %vm915 = vcmp.ge.f32.partialorder %v913, 0.0
  %v916 = vmul.f32 %v913, 0.01
  %v917 = vsel %vm915, %v913, %v916
  %v918 = vld [vmem:[%s0 + $0x268] sm:$0xff]
  %v919 = vld [vmem:[%s0 + $0x270] sm:$0xff]
  %v920 = vld [vmem:[%s0 + $0x278] sm:$0xff]
  %v921 = vld [vmem:[%s0 + $0x280] sm:$0xff]
  %v922 = vld [vmem:[%s0 + $0x288] sm:$0x1]
  %v923 = vperm.slane %v922, 0
  %v925 = vsel %vm383, %v917, 0
  %927 = vmatpush.msra.mxu0 0.0
  %928 = vmatpush.msra.mxu0 0.0
  %929 = vmatpush.msra.mxu0 0.0
  %930 = vmatpush.msra.mxu0 0.0
  %931 = vmatpush.msra.mxu0 0.0
  %932 = vmatpush.msra.mxu0 0.0
  %933 = vmatpush.msra.mxu0 0.0
  %934 = vmatpush.msra.mxu0 0.0
  %935 = vmatpush.msra.mxu0 0.0
  %936 = vmatpush.msra.mxu0 0.0
  %937 = vmatpush.msra.mxu0 0.0
  %938 = vmatpush.msra.mxu0 0.0
  %939 = vmatpush.msra.mxu0 %v921
  %940 = vmatpush.msra.mxu0 %v920
  %941 = vmatpush.msra.mxu0 %v919
  %942 = vmatpush.msra.mxu0 %v918
  %943 = vmatmul.f32.gmra.mxu0 %v925
  %v944 = vpop.f32.mrf.mxu0
  %v945 = vadd.f32 %v923, %v944
  %946 = vdwg.mxu0
  %vm947 = vcmp.ge.f32.partialorder %v945, 0.0
  %v948 = vmul.f32 %v945, 0.01
  %v949 = vsel %vm947, %v945, %v948
  %v950 = vld [vmem:[%s0 + $0x290] sm:$0xff]
  %v951 = vld [vmem:[%s0 + $0x298] sm:$0xff]
  %v952 = vld [vmem:[%s0 + $0x2a0] sm:$0xff]
  %v953 = vld [vmem:[%s0 + $0x2a8] sm:$0xff]
  %v954 = vld [vmem:[%s0 + $0x2b0] sm:$0x1]
  %v955 = vperm.slane %v954, 0
  %v957 = vsel %vm383, %v949, 0
  %959 = vmatpush.msra.mxu0 0.0
  %960 = vmatpush.msra.mxu0 0.0
  %961 = vmatpush.msra.mxu0 0.0
  %962 = vmatpush.msra.mxu0 0.0
  %963 = vmatpush.msra.mxu0 0.0
  %964 = vmatpush.msra.mxu0 0.0
  %965 = vmatpush.msra.mxu0 0.0
  %966 = vmatpush.msra.mxu0 0.0
  %967 = vmatpush.msra.mxu0 0.0
  %968 = vmatpush.msra.mxu0 0.0
  %969 = vmatpush.msra.mxu0 0.0
  %970 = vmatpush.msra.mxu0 0.0
  %971 = vmatpush.msra.mxu0 %v953
  %972 = vmatpush.msra.mxu0 %v952
  %973 = vmatpush.msra.mxu0 %v951
  %974 = vmatpush.msra.mxu0 %v950
  %975 = vmatmul.f32.gmra.mxu0 %v957
  %v976 = vpop.f32.mrf.mxu0
  %v977 = vadd.f32 %v955, %v976
  %978 = vdwg.mxu0
  %980 = vrot.lane.b32.xlu0 %v977, 16
  %v981 = vpop.permute.xlu0 %980
  %vm983 = vcmask 191616
  %984 = vst.msk [vmem:[%s3] sm:$0xf] %vm983, %v981
  // Predicated region
  $region14: #{forward.1} parent=0 // pred_check
    _
  $region15: #{forward.1} parent=0 // pred_check_branch
    %986 = sbr.rel (0) target = $region17
  $region16: #{forward.1} parent=0 // pred_region
    _
  $region17: #{forward.1} parent=0 // pred_fallthru
    _
  // Predicated region
  $region18: #{forward.1} parent=0 // pred_check
    _
  $region19: #{forward.1} parent=0 // pred_check_branch
    %988 = sbr.rel (0) target = $region21
  $region20: #{forward.1} parent=0 // pred_region
    _
  $region21: #{forward.1} parent=0 // pred_fallthru
    _

</llo_original>
